<compile_context>
chip_gen: v6e
topology: v6e:2x2x1
jax: 0.10.0
libtpu: 0.0.40
codegen_flags: <defaults>
</compile_context>

<pallas_src>
import math

import jax
import jax.numpy as jnp
from jax import lax
from jax.experimental import pallas as pl
from jax.experimental.pallas import tpu as pltpu

NEIGHBOR_NUM = 4
BN_EPS = 1e-5
_HP = jax.lax.Precision.HIGHEST


def gnn_graph_kernel(x_ref, wuv_ref, buv_ref, y_ref, stats_ref):
    """Per-batch block: fused U|V projection, top-k graph, normalized aggregation,
    and per-batch partial BatchNorm statistics."""
    x = x_ref[...]                                            # (N, C) f32
    N, C = x.shape

    # --- fused U|V projection: one MXU matmul (default precision), slice halves ---
    uv = jnp.dot(x, wuv_ref[...],
                 preferred_element_type=jnp.float32) + buv_ref[...]    # (N, 2C)
    Ux = uv[:, :C]
    Vx = uv[:, C:]

    # --- per-batch similarity gram (N, N).  Kept at HIGHEST: the adjacency is a hard
    #     threshold on these values; on (N, N) blocks the extra passes are free. ---
    si = jnp.einsum('ic,jc->ij', x, x, precision=_HP,
                    preferred_element_type=jnp.float32)

    # --- top-k threshold, torch.topk tie semantics (k-th largest WITH multiplicity).
    #     k-1 rounds: row max (XLU lane reduce) then mask exactly ONE occurrence of
    #     that max (first occurrence via a lane-iota min reduce); the remaining row
    #     max is the k-th largest value.  adj = (si >= thr) keeps duplicates. ---
    col = lax.broadcasted_iota(jnp.int32, si.shape, 1)
    work = si
    for _ in range(NEIGHBOR_NUM - 1):
        row_max = jnp.max(work, axis=-1, keepdims=True)                 # (N, 1)
        is_max = work == row_max
        first = jnp.min(jnp.where(is_max, col, N), axis=-1, keepdims=True)
        work = jnp.where(col == first, jnp.float32(-jnp.inf), work)
    thr = jnp.max(work, axis=-1, keepdims=True)                         # (N, 1)
    adj = (si >= thr).astype(jnp.float32)

    # --- normalize_digraph fused into the aggregation:
    #     D^{-1/2} adj D^{-1/2} @ Vx == dinv * (adj @ (dinv * Vx)) ---
    deg = jnp.sum(adj, axis=-1, keepdims=True)               # (N, 1), deg >= k >= 1
    dinv = lax.rsqrt(deg)
    agg = dinv * jnp.dot(adj, dinv * Vx, preferred_element_type=jnp.float32)

    y = agg + Ux                                             # BN input, (N, C)
    y_ref[...] = y

    # Per-batch partial BatchNorm stats: per node n, sum and sum-of-squares over C.
    stats_ref[:, 0:1] = jnp.sum(y, axis=-1, keepdims=True)
    stats_ref[:, 1:2] = jnp.sum(y * y, axis=-1, keepdims=True)


def gnn_bn_relu_kernel(x_ref, y_ref, scale_ref, shift_ref, o_ref):
    """Pass 2: folded BatchNorm affine + residual + relu, single lane-dense store."""
    o_ref[...] = jnp.maximum(
        x_ref[...] + y_ref[...] * scale_ref[...] + shift_ref[...], 0.0)


def gnn_forward(x, Uw, Ub, Vw, Vb, gamma, beta):
    B, N, C = x.shape
    xf = x.astype(jnp.float32)

    # Fused U|V weights (PyTorch Linear is x @ W.T + b) and bias.
    Wuv = jnp.concatenate([Uw.T, Vw.T], axis=1).astype(jnp.float32)      # (C, 2C)
    buv = jnp.concatenate([Ub, Vb], axis=0).reshape(1, 2 * C).astype(jnp.float32)

    blk_x = pl.BlockSpec((None, N, C), lambda b: (b, 0, 0))

    # Pass 1: per-batch graph + aggregation + partial stats (batch-parallel grid).
    y, stats = pl.pallas_call(
        gnn_graph_kernel,
        out_shape=(jax.ShapeDtypeStruct((B, N, C), jnp.float32),
                   jax.ShapeDtypeStruct((B, N, 2), jnp.float32)),
        grid=(B,),
        in_specs=[blk_x,
                  pl.BlockSpec((C, 2 * C), lambda b: (0, 0)),
                  pl.BlockSpec((1, 2 * C), lambda b: (0, 0))],
        out_specs=(pl.BlockSpec((None, N, C), lambda b: (b, 0, 0)),
                   pl.BlockSpec((None, N, 2), lambda b: (b, 0, 0))),
        compiler_params=pltpu.CompilerParams(dimension_semantics=("parallel",)),
    )(xf, Wuv, buv)

    # Cross-batch BatchNorm fold: tiny (B, N, 2) -> (N,) glue work.
    # Training-mode BN: biased variance over (batch, C) per node channel n.
    s = jnp.sum(stats, axis=0)                               # (N, 2)
    inv_cnt = jnp.float32(1.0 / (B * C))
    mean = s[:, 0] * inv_cnt                                 # (N,)
    var = s[:, 1] * inv_cnt - mean * mean
    inv_std = lax.rsqrt(var + jnp.float32(BN_EPS))
    scale = gamma.astype(jnp.float32) * inv_std              # (N,)
    shift = beta.astype(jnp.float32) - mean * scale          # (N,)
    # Pre-broadcast once (hoisted, lane-dense) so the kernel has no in-loop broadcast.
    scale2 = jnp.broadcast_to(scale[:, None], (N, C))
    shift2 = jnp.broadcast_to(shift[:, None], (N, C))

    # Pass 2: normalize + residual + relu, one vectorized store per batch block.
    out = pl.pallas_call(
        gnn_bn_relu_kernel,
        out_shape=jax.ShapeDtypeStruct((B, N, C), jnp.float32),
        grid=(B,),
        in_specs=[blk_x,
                  pl.BlockSpec((None, N, C), lambda b: (b, 0, 0)),
                  pl.BlockSpec((N, C), lambda b: (0, 0)),
                  pl.BlockSpec((N, C), lambda b: (0, 0))],
        out_specs=pl.BlockSpec((None, N, C), lambda b: (b, 0, 0)),
        compiler_params=pltpu.CompilerParams(dimension_semantics=("parallel",)),
    )(xf, y, scale2, shift2)
    return out


gnn_forward_jit = jax.jit(gnn_forward)


def gnn_reference(x, Uw, Ub, Vw, Vb, gamma, beta, k=NEIGHBOR_NUM, eps=BN_EPS):
    """Pure-JAX reference mirroring the PyTorch forward (training-mode BN, f32)."""
    si = jnp.einsum('bic,bjc->bij', x, x, precision=_HP)
    thr = jax.lax.top_k(si, k)[0][..., -1][..., None]
    adj = (si >= thr).astype(jnp.float32)
    deg = adj.sum(-1)
    dinv = deg ** -0.5
    A = adj * dinv[:, :, None] * dinv[:, None, :]
    Ux = jnp.einsum('bnc,dc->bnd', x, Uw, precision=_HP) + Ub
    Vx = jnp.einsum('bnc,dc->bnd', x, Vw, precision=_HP) + Vb
    y = jnp.einsum('bij,bjc->bic', A, Vx, precision=_HP) + Ux
    mean = y.mean(axis=(0, 2), keepdims=True)
    var = y.var(axis=(0, 2), keepdims=True)
    yhat = (y - mean) / jnp.sqrt(var + eps)
    yhat = yhat * gamma[None, :, None] + beta[None, :, None]
    return jax.nn.relu(x + yhat)


if __name__ == "__main__":
    B, N, C = 2, 8, 32   # batch=2, num_classes (graph nodes)=8, in_channels=32

    key = jax.random.PRNGKey(0)
    k1, k2, k3, k4, k5 = jax.random.split(key, 5)

    x = jax.random.normal(k1, (B, N, C), dtype=jnp.float32)

    # U/V weights: normal_(0, sqrt(2/in_channels)); biases: PyTorch Linear default.
    std = math.sqrt(2.0 / C)
    Uw = jax.random.normal(k2, (C, C), dtype=jnp.float32) * std
    Vw = jax.random.normal(k3, (C, C), dtype=jnp.float32) * std
    bound = 1.0 / math.sqrt(C)
    Ub = jax.random.uniform(k4, (C,), minval=-bound, maxval=bound, dtype=jnp.float32)
    Vb = jax.random.uniform(k5, (C,), minval=-bound, maxval=bound, dtype=jnp.float32)

    # bnv: weight=1, bias=0 (module init).
    gamma = jnp.ones((N,), dtype=jnp.float32)
    beta = jnp.zeros((N,), dtype=jnp.float32)

    out = jax.block_until_ready(gnn_forward_jit(x, Uw, Ub, Vw, Vb, gamma, beta))
    ref = jax.block_until_ready(gnn_reference(x, Uw, Ub, Vw, Vb, gamma, beta))

    assert out.shape == (B, N, C) and out.dtype == jnp.float32
    # Projection/aggregation matmuls run at default MXU precision (perf review); the
    # graph structure (si / top-k / adj) is HIGHEST so the adjacency matches exactly.
    if not bool(jnp.allclose(out, ref, atol=5e-3, rtol=5e-3)):
        raise SystemExit(f"mismatch: max abs diff = {float(jnp.max(jnp.abs(out - ref)))}")
    print("KERNEL_OK")
</pallas_src>

<mosaic_0001>
module attributes {stable_mosaic.version = 11 : i64} {
  func.func @gnn_graph_kernel(%arg0: i32, %arg1: memref<1x8x32xf32, #tpu.memory_space<vmem>>, %arg2: memref<32x64xf32, #tpu.memory_space<vmem>>, %arg3: memref<1x64xf32, #tpu.memory_space<vmem>>, %arg4: memref<1x8x32xf32, #tpu.memory_space<vmem>>, %arg5: memref<1x8x2xf32, #tpu.memory_space<vmem>>) attributes {dimension_semantics = [#tpu.dimension_semantics<parallel>], iteration_bounds = array<i64: 2>, scalar_prefetch = 0 : i64, scratch_operands = 0 : i64, tpu.core_type = #tpu.core_type<tc>, window_params = [{transform_indices = @transform_0, window_bounds = array<i64: 1, 8, 32>}, {pipeline_mode = #tpu.pipeline_mode<synchronous>, transform_indices = @transform_1, window_bounds = array<i64: 32, 64>}, {pipeline_mode = #tpu.pipeline_mode<synchronous>, transform_indices = @transform_2, window_bounds = array<i64: 1, 64>}, {transform_indices = @transform_3, window_bounds = array<i64: 1, 8, 32>}, {transform_indices = @transform_4, window_bounds = array<i64: 1, 8, 2>}]} {
    %c0 = arith.constant 0 : index
    %c0_0 = arith.constant 0 : index
    %c0_1 = arith.constant 0 : index
    %0 = vector.load %arg1[%c0, %c0_0, %c0_1] : memref<1x8x32xf32, #tpu.memory_space<vmem>>, vector<1x8x32xf32>
    %1 = vector.shape_cast %0 : vector<1x8x32xf32> to vector<8x32xf32>
    %c0_2 = arith.constant 0 : index
    %c0_3 = arith.constant 0 : index
    %2 = vector.load %arg2[%c0_2, %c0_3] : memref<32x64xf32, #tpu.memory_space<vmem>>, vector<32x64xf32>
    %cst = arith.constant dense<0.000000e+00> : vector<8x64xf32>
    %3 = tpu.matmul %1, %2, %cst {dimension_numbers = #tpu.dot_dimension_numbers<[1], [0], [0], [1], [0, 0, 1, 1], [], []>} : vector<8x32xf32>, vector<32x64xf32>, vector<8x64xf32> -> vector<8x64xf32>
    %c0_4 = arith.constant 0 : index
    %c0_5 = arith.constant 0 : index
    %4 = vector.load %arg3[%c0_4, %c0_5] : memref<1x64xf32, #tpu.memory_space<vmem>>, vector<1x64xf32>
    %5 = vector.broadcast %4 : vector<1x64xf32> to vector<8x64xf32>
    %6 = arith.addf %3, %5 : vector<8x64xf32>
    %7 = vector.extract_strided_slice %6 {offsets = [0, 0], sizes = [8, 32], strides = [1, 1]} : vector<8x64xf32> to vector<8x32xf32>
    %8 = vector.extract_strided_slice %6 {offsets = [0, 32], sizes = [8, 32], strides = [1, 1]} : vector<8x64xf32> to vector<8x32xf32>
    "tpu.trace_start"() <{level = 10 : i32, message = "ic,jc->ij"}> : () -> ()
    %cst_6 = arith.constant dense<0.000000e+00> : vector<8x8xf32>
    %9 = tpu.matmul %1, %1, %cst_6 {dimension_numbers = #tpu.dot_dimension_numbers<[1], [1], [0], [0], [0, 0, 1, 0], [], []>, precision = #tpu.contract_precision<fp32>} : vector<8x32xf32>, vector<8x32xf32>, vector<8x8xf32> -> vector<8x8xf32>
    "tpu.trace_stop"() : () -> ()
    %10 = tpu.iota {dimensions = array<i32: 1>} : vector<8x8xi32>
    %cst_7 = arith.constant dense<0xFF800000> : vector<8xf32>
    %11 = vector.multi_reduction <maximumf>, %9, %cst_7 [1] : vector<8x8xf32> to vector<8xf32>
    %12 = vector.shape_cast %11 : vector<8xf32> to vector<8x1xf32>
    %13 = vector.broadcast %12 : vector<8x1xf32> to vector<8x8xf32>
    %14 = arith.cmpf oeq, %9, %13 : vector<8x8xf32>
    %c8_i32 = arith.constant 8 : i32
    %15 = vector.broadcast %c8_i32 : i32 to vector<8x8xi32>
    %16 = arith.select %14, %10, %15 : vector<8x8xi1>, vector<8x8xi32>
    %cst_8 = arith.constant dense<2147483647> : vector<8xi32>
    %17 = vector.multi_reduction <minsi>, %16, %cst_8 [1] : vector<8x8xi32> to vector<8xi32>
    %18 = vector.shape_cast %17 : vector<8xi32> to vector<8x1xi32>
    %19 = vector.broadcast %18 : vector<8x1xi32> to vector<8x8xi32>
    %20 = arith.cmpi eq, %10, %19 : vector<8x8xi32>
    %cst_9 = arith.constant 0xFF800000 : f32
    %21 = vector.broadcast %cst_9 : f32 to vector<8x8xf32>
    %22 = arith.select %20, %21, %9 : vector<8x8xi1>, vector<8x8xf32>
    %cst_10 = arith.constant dense<0xFF800000> : vector<8xf32>
    %23 = vector.multi_reduction <maximumf>, %22, %cst_10 [1] : vector<8x8xf32> to vector<8xf32>
    %24 = vector.shape_cast %23 : vector<8xf32> to vector<8x1xf32>
    %25 = vector.broadcast %24 : vector<8x1xf32> to vector<8x8xf32>
    %26 = arith.cmpf oeq, %22, %25 : vector<8x8xf32>
    %c8_i32_11 = arith.constant 8 : i32
    %27 = vector.broadcast %c8_i32_11 : i32 to vector<8x8xi32>
    %28 = arith.select %26, %10, %27 : vector<8x8xi1>, vector<8x8xi32>
    %cst_12 = arith.constant dense<2147483647> : vector<8xi32>
    %29 = vector.multi_reduction <minsi>, %28, %cst_12 [1] : vector<8x8xi32> to vector<8xi32>
    %30 = vector.shape_cast %29 : vector<8xi32> to vector<8x1xi32>
    %31 = vector.broadcast %30 : vector<8x1xi32> to vector<8x8xi32>
    %32 = arith.cmpi eq, %10, %31 : vector<8x8xi32>
    %cst_13 = arith.constant 0xFF800000 : f32
    %33 = vector.broadcast %cst_13 : f32 to vector<8x8xf32>
    %34 = arith.select %32, %33, %22 : vector<8x8xi1>, vector<8x8xf32>
    %cst_14 = arith.constant dense<0xFF800000> : vector<8xf32>
    %35 = vector.multi_reduction <maximumf>, %34, %cst_14 [1] : vector<8x8xf32> to vector<8xf32>
    %36 = vector.shape_cast %35 : vector<8xf32> to vector<8x1xf32>
    %37 = vector.broadcast %36 : vector<8x1xf32> to vector<8x8xf32>
    %38 = arith.cmpf oeq, %34, %37 : vector<8x8xf32>
    %c8_i32_15 = arith.constant 8 : i32
    %39 = vector.broadcast %c8_i32_15 : i32 to vector<8x8xi32>
    %40 = arith.select %38, %10, %39 : vector<8x8xi1>, vector<8x8xi32>
    %cst_16 = arith.constant dense<2147483647> : vector<8xi32>
    %41 = vector.multi_reduction <minsi>, %40, %cst_16 [1] : vector<8x8xi32> to vector<8xi32>
    %42 = vector.shape_cast %41 : vector<8xi32> to vector<8x1xi32>
    %43 = vector.broadcast %42 : vector<8x1xi32> to vector<8x8xi32>
    %44 = arith.cmpi eq, %10, %43 : vector<8x8xi32>
    %cst_17 = arith.constant 0xFF800000 : f32
    %45 = vector.broadcast %cst_17 : f32 to vector<8x8xf32>
    %46 = arith.select %44, %45, %34 : vector<8x8xi1>, vector<8x8xf32>
    %cst_18 = arith.constant dense<0xFF800000> : vector<8xf32>
    %47 = vector.multi_reduction <maximumf>, %46, %cst_18 [1] : vector<8x8xf32> to vector<8xf32>
    %48 = vector.shape_cast %47 : vector<8xf32> to vector<8x1xf32>
    %49 = vector.broadcast %48 : vector<8x1xf32> to vector<8x8xf32>
    %50 = arith.cmpf oge, %9, %49 : vector<8x8xf32>
    %51 = arith.extui %50 : vector<8x8xi1> to vector<8x8xi32>
    %52 = arith.sitofp %51 : vector<8x8xi32> to vector<8x8xf32>
    %cst_19 = arith.constant dense<0.000000e+00> : vector<8xf32>
    %53 = vector.multi_reduction <add>, %52, %cst_19 [1] : vector<8x8xf32> to vector<8xf32>
    %54 = vector.shape_cast %53 : vector<8xf32> to vector<8x1xf32>
    %55 = math.rsqrt %54 : vector<8x1xf32>
    %56 = vector.broadcast %55 : vector<8x1xf32> to vector<8x32xf32>
    %57 = arith.mulf %56, %8 : vector<8x32xf32>
    %cst_20 = arith.constant dense<0.000000e+00> : vector<8x32xf32>
    %58 = tpu.matmul %52, %57, %cst_20 {dimension_numbers = #tpu.dot_dimension_numbers<[1], [0], [0], [1], [0, 0, 1, 1], [], []>} : vector<8x8xf32>, vector<8x32xf32>, vector<8x32xf32> -> vector<8x32xf32>
    %59 = vector.broadcast %55 : vector<8x1xf32> to vector<8x32xf32>
    %60 = arith.mulf %59, %58 : vector<8x32xf32>
    %61 = arith.addf %60, %7 : vector<8x32xf32>
    %c0_21 = arith.constant 0 : index
    %c0_22 = arith.constant 0 : index
    %c0_23 = arith.constant 0 : index
    %62 = vector.load %arg4[%c0_21, %c0_22, %c0_23] : memref<1x8x32xf32, #tpu.memory_space<vmem>>, vector<1x8x32xf32>
    %63 = vector.shape_cast %62 : vector<1x8x32xf32> to vector<8x32xf32>
    %64 = vector.shape_cast %61 : vector<8x32xf32> to vector<1x8x32xf32>
    tpu.vector_store %arg4[%c0_21, %c0_22, %c0_23], %64 {strides = array<i32>} : memref<1x8x32xf32, #tpu.memory_space<vmem>>, vector<1x8x32xf32>,
    %cst_24 = arith.constant dense<0.000000e+00> : vector<8xf32>
    %65 = vector.multi_reduction <add>, %61, %cst_24 [1] : vector<8x32xf32> to vector<8xf32>
    %66 = vector.shape_cast %65 : vector<8xf32> to vector<8x1xf32>
    %c0_25 = arith.constant 0 : index
    %c0_26 = arith.constant 0 : index
    %c0_27 = arith.constant 0 : index
    %67 = vector.load %arg5[%c0_25, %c0_26, %c0_27] : memref<1x8x2xf32, #tpu.memory_space<vmem>>, vector<1x8x1xf32>
    %68 = vector.shape_cast %67 : vector<1x8x1xf32> to vector<8x1xf32>
    %69 = vector.shape_cast %66 : vector<8x1xf32> to vector<1x8x1xf32>
    tpu.vector_store %arg5[%c0_25, %c0_26, %c0_27], %69 {strides = array<i32>} : memref<1x8x2xf32, #tpu.memory_space<vmem>>, vector<1x8x1xf32>,
    %70 = arith.mulf %61, %61 : vector<8x32xf32>
    %cst_28 = arith.constant dense<0.000000e+00> : vector<8xf32>
    %71 = vector.multi_reduction <add>, %70, %cst_28 [1] : vector<8x32xf32> to vector<8xf32>
    %72 = vector.shape_cast %71 : vector<8xf32> to vector<8x1xf32>
    %c0_29 = arith.constant 0 : index
    %c0_30 = arith.constant 0 : index
    %c1 = arith.constant 1 : index
    %73 = vector.load %arg5[%c0_29, %c0_30, %c1] : memref<1x8x2xf32, #tpu.memory_space<vmem>>, vector<1x8x1xf32>
    %74 = vector.shape_cast %73 : vector<1x8x1xf32> to vector<8x1xf32>
    %75 = vector.shape_cast %72 : vector<8x1xf32> to vector<1x8x1xf32>
    tpu.vector_store %arg5[%c0_29, %c0_30, %c1], %75 {strides = array<i32>} : memref<1x8x2xf32, #tpu.memory_space<vmem>>, vector<1x8x1xf32>,
    return
  }
  func.func @transform_0(%arg0: i32) -> (i32, i32, i32) {
    %c0_i32 = arith.constant 0 : i32
    %c0_i32_0 = arith.constant 0 : i32
    %c0_i32_1 = arith.constant 0 : i32
    return %arg0, %c0_i32, %c0_i32_0 : i32, i32, i32
  }
  func.func @transform_1(%arg0: i32) -> (i32, i32) {
    %c0_i32 = arith.constant 0 : i32
    %c0_i32_0 = arith.constant 0 : i32
    %c0_i32_1 = arith.constant 0 : i32
    return %c0_i32, %c0_i32_0 : i32, i32
  }
  func.func @transform_2(%arg0: i32) -> (i32, i32) {
    %c0_i32 = arith.constant 0 : i32
    %c0_i32_0 = arith.constant 0 : i32
    %c0_i32_1 = arith.constant 0 : i32
    return %c0_i32, %c0_i32_0 : i32, i32
  }
  func.func @transform_3(%arg0: i32) -> (i32, i32, i32) {
    %c0_i32 = arith.constant 0 : i32
    %c0_i32_0 = arith.constant 0 : i32
    %c0_i32_1 = arith.constant 0 : i32
    return %arg0, %c0_i32, %c0_i32_0 : i32, i32, i32
  }
  func.func @transform_4(%arg0: i32) -> (i32, i32, i32) {
    %c0_i32 = arith.constant 0 : i32
    %c0_i32_0 = arith.constant 0 : i32
    %c0_i32_1 = arith.constant 0 : i32
    return %arg0, %c0_i32, %c0_i32_0 : i32, i32, i32
  }
}

module attributes {stable_mosaic.version = 11 : i64} {
  func.func @gnn_bn_relu_kernel(%arg0: i32, %arg1: memref<1x8x32xf32, #tpu.memory_space<vmem>>, %arg2: memref<1x8x32xf32, #tpu.memory_space<vmem>>, %arg3: memref<8x32xf32, #tpu.memory_space<vmem>>, %arg4: memref<8x32xf32, #tpu.memory_space<vmem>>, %arg5: memref<1x8x32xf32, #tpu.memory_space<vmem>>) attributes {dimension_semantics = [#tpu.dimension_semantics<parallel>], iteration_bounds = array<i64: 2>, scalar_prefetch = 0 : i64, scratch_operands = 0 : i64, tpu.core_type = #tpu.core_type<tc>, window_params = [{transform_indices = @transform_0, window_bounds = array<i64: 1, 8, 32>}, {transform_indices = @transform_1, window_bounds = array<i64: 1, 8, 32>}, {pipeline_mode = #tpu.pipeline_mode<synchronous>, transform_indices = @transform_2, window_bounds = array<i64: 8, 32>}, {pipeline_mode = #tpu.pipeline_mode<synchronous>, transform_indices = @transform_3, window_bounds = array<i64: 8, 32>}, {transform_indices = @transform_4, window_bounds = array<i64: 1, 8, 32>}]} {
    %c0 = arith.constant 0 : index
    %c0_0 = arith.constant 0 : index
    %c0_1 = arith.constant 0 : index
    %0 = vector.load %arg1[%c0, %c0_0, %c0_1] : memref<1x8x32xf32, #tpu.memory_space<vmem>>, vector<1x8x32xf32>
    %1 = vector.shape_cast %0 : vector<1x8x32xf32> to vector<8x32xf32>
    %c0_2 = arith.constant 0 : index
    %c0_3 = arith.constant 0 : index
    %c0_4 = arith.constant 0 : index
    %2 = vector.load %arg2[%c0_2, %c0_3, %c0_4] : memref<1x8x32xf32, #tpu.memory_space<vmem>>, vector<1x8x32xf32>
    %3 = vector.shape_cast %2 : vector<1x8x32xf32> to vector<8x32xf32>
    %c0_5 = arith.constant 0 : index
    %c0_6 = arith.constant 0 : index
    %4 = vector.load %arg3[%c0_5, %c0_6] : memref<8x32xf32, #tpu.memory_space<vmem>>, vector<8x32xf32>
    %5 = arith.mulf %3, %4 : vector<8x32xf32>
    %6 = arith.addf %1, %5 : vector<8x32xf32>
    %c0_7 = arith.constant 0 : index
    %c0_8 = arith.constant 0 : index
    %7 = vector.load %arg4[%c0_7, %c0_8] : memref<8x32xf32, #tpu.memory_space<vmem>>, vector<8x32xf32>
    %8 = arith.addf %6, %7 : vector<8x32xf32>
    %cst = arith.constant 0.000000e+00 : f32
    %9 = vector.broadcast %cst : f32 to vector<8x32xf32>
    %10 = arith.maximumf %8, %9 : vector<8x32xf32>
    %c0_9 = arith.constant 0 : index
    %c0_10 = arith.constant 0 : index
    %c0_11 = arith.constant 0 : index
    %11 = vector.load %arg5[%c0_9, %c0_10, %c0_11] : memref<1x8x32xf32, #tpu.memory_space<vmem>>, vector<1x8x32xf32>
    %12 = vector.shape_cast %11 : vector<1x8x32xf32> to vector<8x32xf32>
    %13 = vector.shape_cast %10 : vector<8x32xf32> to vector<1x8x32xf32>
    tpu.vector_store %arg5[%c0_9, %c0_10, %c0_11], %13 {strides = array<i32>} : memref<1x8x32xf32, #tpu.memory_space<vmem>>, vector<1x8x32xf32>,
    return
  }
  func.func @transform_0(%arg0: i32) -> (i32, i32, i32) {
    %c0_i32 = arith.constant 0 : i32
    %c0_i32_0 = arith.constant 0 : i32
    %c0_i32_1 = arith.constant 0 : i32
    return %arg0, %c0_i32, %c0_i32_0 : i32, i32, i32
  }
  func.func @transform_1(%arg0: i32) -> (i32, i32, i32) {
    %c0_i32 = arith.constant 0 : i32
    %c0_i32_0 = arith.constant 0 : i32
    %c0_i32_1 = arith.constant 0 : i32
    return %arg0, %c0_i32, %c0_i32_0 : i32, i32, i32
  }
  func.func @transform_2(%arg0: i32) -> (i32, i32) {
    %c0_i32 = arith.constant 0 : i32
    %c0_i32_0 = arith.constant 0 : i32
    %c0_i32_1 = arith.constant 0 : i32
    return %c0_i32, %c0_i32_0 : i32, i32
  }
  func.func @transform_3(%arg0: i32) -> (i32, i32) {
    %c0_i32 = arith.constant 0 : i32
    %c0_i32_0 = arith.constant 0 : i32
    %c0_i32_1 = arith.constant 0 : i32
    return %c0_i32, %c0_i32_0 : i32, i32
  }
  func.func @transform_4(%arg0: i32) -> (i32, i32, i32) {
    %c0_i32 = arith.constant 0 : i32
    %c0_i32_0 = arith.constant 0 : i32
    %c0_i32_1 = arith.constant 0 : i32
    return %arg0, %c0_i32, %c0_i32_0 : i32, i32, i32
  }
}

</mosaic_0001>

<llo_original>
// kernel: gnn_forward.3
$region0: #{gnn_forward.3}
  #allocation0 [shape = 'u32[]', space=smem, size = 0x4, offset = 0x4, fixed_abs, tag = 'smem constant byte address 0x4 - core index']
  #allocation1 [shape = 'u32[144,128]{1,0:T(1,128)}', space=vmem, size = 0x12000, scoped, tag = 'internal scratch']
  %s0 = inlined_call_operand.vmem [shape: f32[2,8,32], index: 0, kind: input, shape index: {}]
  %s1 = inlined_call_operand.vmem [shape: f32[2,8,32], index: 1, kind: input, shape index: {}]
  %s2 = inlined_call_operand.vmem [shape: f32[8,32], index: 2, kind: input, shape index: {}]
  %s3 = inlined_call_operand.vmem [shape: f32[8,32], index: 3, kind: input, shape index: {}]
  %s4 = inlined_call_operand.hbm [shape: f32[2,8,32], index: 4, kind: output, shape index: {}]
  %s5 = sld [smem:[#allocation0]]
  $region49: #{gnn_forward.3} parent=0
    _
  %s7 = ssub.s32 1, %s5
  %s8 = scalar_select 0, %s7, %s5
  $region1: #{gnn_forward.3} parent=0
    #allocation2 [shape = 'u8[8192]{0}', space=vmem, size = 0x2000, scoped, tag = 'output window, operand 0']
    #allocation3 [shape = 's32[2]{0}', space=sflag, size = 0x8, scoped, tag = 'scoped memory for gnn_forward.3']
    %9 = vsyncpa [#allocation3], 0
    %s10 = scalar_lea.sflag [#allocation3], 1
    %11 = vsyncpa %s10, 0
    loop: start=0, step=1, limit=4
    $region2: #{gnn_forward.3} parent=1 // loop_pre_header
      _
    $region3: #{gnn_forward.3} parent=1 // loop_header
      %s13 = sphi 0, %s17
      %p14 = scmp.ge.s32.totalorder %s13, 4
      %s23 = sphi 0, %s25
      %s26 = sphi 0, %s23
      %s27 = sphi 0, %s26
      %s43 = sphi 0, %s27
      %s49 = sphi 0, %s51
      %s52 = sphi 0, %s49
      %s53 = sphi 0, %s52
      %s69 = sphi 0, %s53
      %s73 = sphi 0, %s73
      %s75 = sphi 0, %s73
      %s76 = sphi 0, %s75
      %s90 = sphi 0, %s76
      %s94 = sphi 0, %s94
      %s96 = sphi 0, %s94
      %s97 = sphi 0, %s96
      %s111 = sphi 0, %s97
      %s117 = sphi 0, %s119
      %s120 = sphi 0, %s117
      %s121 = sphi 0, %s120
      %s137 = sphi 0, %s121
    $region4: #{gnn_forward.3} parent=1 // loop_header_branch
      %16 = sbr.rel (%p14) target = $region8
    $region5: #{gnn_forward.3} parent=1 // loop_body
      %s18 = ssub.s32 %s13, 1
      %s19 = ssub.s32 %s13, 2
      %s20 = sadd.s32 %s13, 1
      %s21 = ssub.s32 %s13, %s20
      %p22 = scmp.eq.s32.totalorder %s21, 0
      %s24 = sadd.s32 %s23, 1
      %s25 = scalar_select %p22, %s23, %s24
      %p28 = pneg %p22
      %p29 = scmp.eq.s32.totalorder %s13, 1
      %p30 = por %p28, %p29
      %p31 = scmp.ne.s32.totalorder %s23, %s26
      %p32 = scmp.eq.s32.totalorder %s13, 0
      %p33 = por %p31, %p32
      %p34 = scmp.ne.s32.totalorder %s23, %s26
      %p35 = scmp.eq.s32.totalorder %s18, 1
      %p36 = por %p34, %p35
      %p37 = scmp.ne.s32.totalorder %s26, %s27
      %p38 = scmp.eq.s32.totalorder %s18, 0
      %p39 = por %p37, %p38
      %p40 = scmp.ne.s32.totalorder %s26, %s27
      %p41 = scmp.eq.s32.totalorder %s19, 1
      %p42 = por %p40, %p41
      %p44 = scmp.ne.s32.totalorder %s27, %s43
      %p45 = scmp.eq.s32.totalorder %s19, 0
      %p46 = por %p44, %p45
      %s47 = ssub.s32 %s13, %s20
      %p48 = scmp.eq.s32.totalorder %s47, 0
      %s50 = sadd.s32 %s49, 1
      %s51 = scalar_select %p48, %s49, %s50
      %p54 = pneg %p48
      %p55 = scmp.eq.s32.totalorder %s13, 1
      %p56 = por %p54, %p55
      %p57 = scmp.ne.s32.totalorder %s49, %s52
      %p58 = scmp.eq.s32.totalorder %s13, 0
      %p59 = por %p57, %p58
      %p60 = scmp.ne.s32.totalorder %s49, %s52
      %p61 = scmp.eq.s32.totalorder %s18, 1
      %p62 = por %p60, %p61
      %p63 = scmp.ne.s32.totalorder %s52, %s53
      %p64 = scmp.eq.s32.totalorder %s18, 0
      %p65 = por %p63, %p64
      %p66 = scmp.ne.s32.totalorder %s52, %s53
      %p67 = scmp.eq.s32.totalorder %s19, 1
      %p68 = por %p66, %p67
      %p70 = scmp.ne.s32.totalorder %s53, %s69
      %p71 = scmp.eq.s32.totalorder %s19, 0
      %p72 = por %p70, %p71
      %s74 = sadd.s32 %s73, 1
      %p77 = scmp.eq.s32.totalorder %s13, 1
      %p78 = scmp.ne.s32.totalorder %s73, %s75
      %p79 = scmp.eq.s32.totalorder %s13, 0
      %p80 = por %p78, %p79
      %p81 = scmp.ne.s32.totalorder %s73, %s75
      %p82 = scmp.eq.s32.totalorder %s18, 1
      %p83 = por %p81, %p82
      %p84 = scmp.ne.s32.totalorder %s75, %s76
      %p85 = scmp.eq.s32.totalorder %s18, 0
      %p86 = por %p84, %p85
      %p87 = scmp.ne.s32.totalorder %s75, %s76
      %p88 = scmp.eq.s32.totalorder %s19, 1
      %p89 = por %p87, %p88
      %p91 = scmp.ne.s32.totalorder %s76, %s90
      %p92 = scmp.eq.s32.totalorder %s19, 0
      %p93 = por %p91, %p92
      %s95 = sadd.s32 %s94, 1
      %p98 = scmp.eq.s32.totalorder %s13, 1
      %p99 = scmp.ne.s32.totalorder %s94, %s96
      %p100 = scmp.eq.s32.totalorder %s13, 0
      %p101 = por %p99, %p100
      %p102 = scmp.ne.s32.totalorder %s94, %s96
      %p103 = scmp.eq.s32.totalorder %s18, 1
      %p104 = por %p102, %p103
      %p105 = scmp.ne.s32.totalorder %s96, %s97
      %p106 = scmp.eq.s32.totalorder %s18, 0
      %p107 = por %p105, %p106
      %p108 = scmp.ne.s32.totalorder %s96, %s97
      %p109 = scmp.eq.s32.totalorder %s19, 1
      %p110 = por %p108, %p109
      %p112 = scmp.ne.s32.totalorder %s97, %s111
      %p113 = scmp.eq.s32.totalorder %s19, 0
      %p114 = por %p112, %p113
      %s115 = ssub.s32 %s13, %s20
      %p116 = scmp.eq.s32.totalorder %s115, 0
      %s118 = sadd.s32 %s117, 1
      %s119 = scalar_select %p116, %s117, %s118
      %p122 = pneg %p116
      %p123 = scmp.eq.s32.totalorder %s13, 1
      %p124 = por %p122, %p123
      %p125 = scmp.ne.s32.totalorder %s117, %s120
      %p126 = scmp.eq.s32.totalorder %s13, 0
      %p127 = por %p125, %p126
      %p128 = scmp.ne.s32.totalorder %s117, %s120
      %p129 = scmp.eq.s32.totalorder %s18, 1
      %p130 = por %p128, %p129
      %p131 = scmp.ne.s32.totalorder %s120, %s121
      %p132 = scmp.eq.s32.totalorder %s18, 0
      %p133 = por %p131, %p132
      %p134 = scmp.ne.s32.totalorder %s120, %s121
      %p135 = scmp.eq.s32.totalorder %s19, 1
      %p136 = por %p134, %p135
      %p138 = scmp.ne.s32.totalorder %s121, %s137
      %p139 = scmp.eq.s32.totalorder %s19, 0
      %p140 = por %p138, %p139
      %p141 = scmp.le.s32.totalorder 1, %s13
      %p142 = scmp.lt.s32.totalorder %s13, 3
      %p143 = pnand %p141, %p142
      %p144 = pneg %p143
      // Predicated region
      $region9: #{gnn_forward.3} parent=5 // pred_check
        _
      $region10: #{gnn_forward.3} parent=5 // pred_check_branch
        %146 = sbr.rel (%p143) target = $region12
      $region11: #{gnn_forward.3} parent=5 // pred_region
        %s147 = ssub.s32 %s13, 1
        // Predicated region
        $region13: #{gnn_forward.3} parent=11 // pred_check
          %p148 = pneg %p86
        $region14: #{gnn_forward.3} parent=11 // pred_check_branch
          %150 = sbr.rel (%p148) target = $region16
        $region15: #{gnn_forward.3} parent=11 // pred_region
          _
        $region16: #{gnn_forward.3} parent=11 // pred_fallthru
          _
        // Predicated region
        $region17: #{gnn_forward.3} parent=11 // pred_check
          %p151 = pneg %p107
        $region18: #{gnn_forward.3} parent=11 // pred_check_branch
          %153 = sbr.rel (%p151) target = $region20
        $region19: #{gnn_forward.3} parent=11 // pred_region
          _
        $region20: #{gnn_forward.3} parent=11 // pred_fallthru
          _
      $region12: #{gnn_forward.3} parent=5 // pred_fallthru
        _
      %p154 = scmp.lt.s32.totalorder %s13, 2
      // Predicated region
      $region21: #{gnn_forward.3} parent=5 // pred_check
        %p155 = pneg %p154
      $region22: #{gnn_forward.3} parent=5 // pred_check_branch
        %157 = sbr.rel (%p155) target = $region24
      $region23: #{gnn_forward.3} parent=5 // pred_region
        // Predicated region
        $region25: #{gnn_forward.3} parent=23 // pred_check
          %p158 = pneg %p33
        $region26: #{gnn_forward.3} parent=23 // pred_check_branch
          %160 = sbr.rel (%p158) target = $region28
        $region27: #{gnn_forward.3} parent=23 // pred_region
          %p161 = scmp.lt.s32.totalorder %s13, 1
          %s162 = scalar_select %p161, %s13, 1
          %s163 = smul.addr %s162, 8
          %s164 = scalar_lea.vmem %s0, %s163
        $region28: #{gnn_forward.3} parent=23 // pred_fallthru
          _
        // Predicated region
        $region29: #{gnn_forward.3} parent=23 // pred_check
          %p165 = pneg %p59
        $region30: #{gnn_forward.3} parent=23 // pred_check_branch
          %167 = sbr.rel (%p165) target = $region32
        $region31: #{gnn_forward.3} parent=23 // pred_region
          %p168 = scmp.lt.s32.totalorder %s13, 1
          %s169 = scalar_select %p168, %s13, 1
          %s170 = smul.addr %s169, 8
          %s171 = scalar_lea.vmem %s1, %s170
        $region32: #{gnn_forward.3} parent=23 // pred_fallthru
          _
      $region24: #{gnn_forward.3} parent=5 // pred_fallthru
        _
      %p172 = scmp.le.s32.totalorder 1, %s13
      %p173 = scmp.lt.s32.totalorder %s13, 3
      %p174 = pnand %p172, %p173
      %p175 = pneg %p174
      // Predicated region
      $region33: #{gnn_forward.3} parent=5 // pred_check
        _
      $region34: #{gnn_forward.3} parent=5 // pred_check_branch
        %177 = sbr.rel (%p174) target = $region36
      $region35: #{gnn_forward.3} parent=5 // pred_region
        %s178 = ssub.s32 %s13, 1
        %p179 = scmp.lt.s32.totalorder %s18, 1
        %s180 = scalar_select %p179, %s18, 1
        %s181 = smul.addr %s180, 8
        %s182 = scalar_lea.vmem %s0, %s181
        %p183 = pneg %p39
        %p184 = pneg %p36
        %p185 = scmp.lt.s32.totalorder %s18, 1
        %s186 = scalar_select %p185, %s18, 1
        %s187 = smul.addr %s186, 8
        %s188 = scalar_lea.vmem %s1, %s187
        %p189 = pneg %p65
        %p190 = pneg %p62
        %p191 = pneg %p86
        %p192 = pneg %p83
        %p193 = pneg %p107
        %p194 = pneg %p104
        %p195 = pneg %p133
        %p196 = pneg %p130
        %s197 = sand.u32 %s120, 1
        %s198 = scalar_lea.sflag [#allocation3], %s197
        %s199 = sand.u32 %s120, 1
        %s200 = smul.addr %s199, 8
        %s201 = scalar_lea.vmem [#allocation2], %s200
        %p202 = scmp.lt.s32.totalorder %s18, 1
        %s203 = scalar_select %p202, %s18, 1
        %s204 = smul.addr %s203, 8
        %s205 = scalar_lea.vmem %s0, %s204
        %p206 = scmp.lt.s32.totalorder %s18, 1
        %s207 = scalar_select %p206, %s18, 1
        %s208 = smul.addr %s207, 8
        %s209 = scalar_lea.vmem %s1, %s208
        %v210 = vld [vmem:[%s205] sm:$0xff]
        %v211 = vld [vmem:[%s209] sm:$0xff]
        %v212 = vld [vmem:[%s2] sm:$0xff]
        %v213 = vmul.f32 %v211, %v212
        %v214 = vadd.f32 %v210, %v213
        %v215 = vld [vmem:[%s3] sm:$0xff]
        %v216 = vadd.f32 %v214, %v215
        %v217 = vmax.f32 %v216, 0.0
        %vm218 = vcmask 261120
        %219 = vst.msk [vmem:[%s201] sm:$0xff] %vm218, %v217
        %s220 = sand.u32 %s120, 1
        %s221 = scalar_lea.sflag [#allocation3], %s220
        %s222 = sand.u32 %s120, 1
        %s223 = smul.addr %s222, 8
        %s224 = scalar_lea.vmem [#allocation2], %s223
        // Predicated region
        $region37: #{gnn_forward.3} parent=35 // pred_check
          %p225 = pneg %p130
        $region38: #{gnn_forward.3} parent=35 // pred_check_branch
          %227 = sbr.rel (%p225) target = $region40
        $region39: #{gnn_forward.3} parent=35 // pred_region
          %s229 = ssub.s32 128, 128
          %230 = vsyncadd %s221, %s229
          %s231 = smul.addr %s18, 128
          %s232 = scalar_lea.hbm %s4, %s231
          %s234 = sshll.u32 %s224, 4
          %s235 = int_to_ptr.vmem [resolvable:$true] %s234
          %237 = dma.vmem_to_hbm [thread:$0]  %s235, 128, %s232, %s221
        $region40: #{gnn_forward.3} parent=35 // pred_fallthru
          _
      $region36: #{gnn_forward.3} parent=5 // pred_fallthru
        _
      %p238 = scmp.le.s32.totalorder 2, %s13
      // Predicated region
      $region41: #{gnn_forward.3} parent=5 // pred_check
        %p239 = pneg %p238
      $region42: #{gnn_forward.3} parent=5 // pred_check_branch
        %241 = sbr.rel (%p239) target = $region44
      $region43: #{gnn_forward.3} parent=5 // pred_region
        %s242 = ssub.s32 %s13, 2
        // Predicated region
        $region45: #{gnn_forward.3} parent=43 // pred_check
          %p243 = pneg %p136
        $region46: #{gnn_forward.3} parent=43 // pred_check_branch
          %245 = sbr.rel (%p243) target = $region48
        $region47: #{gnn_forward.3} parent=43 // pred_region
          %s246 = sand.u32 %s121, 1
          %s247 = scalar_lea.sflag [#allocation3], %s246
          %s248 = sand.u32 %s121, 1
          %s249 = smul.addr %s248, 8
          %s250 = scalar_lea.vmem [#allocation2], %s249
          %251 = dma.done %s247, 128
        $region48: #{gnn_forward.3} parent=43 // pred_fallthru
          _
      $region44: #{gnn_forward.3} parent=5 // pred_fallthru
        _
    $region6: #{gnn_forward.3} parent=1 // loop_footer
      %s17 = sadd.s32 1, %s13
    $region7: #{gnn_forward.3} parent=1 // loop_footer_branch
      %12 = sbr.rel target = $region3
    $region8: #{gnn_forward.3} parent=1 // loop_exit
      _
    %252 = vsyncpa [#allocation3], 1
    %s253 = scalar_lea.sflag [#allocation3], 1
    %254 = vsyncpa %s253, 1

// kernel: gnn_forward.2
$region0: #{gnn_forward.2}
  #allocation0 [shape = 'u32[]', space=smem, size = 0x4, offset = 0x4, fixed_abs, tag = 'smem constant byte address 0x4 - core index']
  #allocation1 [shape = 'u32[144,128]{1,0:T(1,128)}', space=vmem, size = 0x12000, scoped, tag = 'internal scratch']
  %s0 = inlined_call_operand.vmem [shape: f32[2,8,32], index: 0, kind: input, shape index: {}]
  %s1 = inlined_call_operand.vmem [shape: f32[32,64], index: 1, kind: input, shape index: {}]
  %s2 = inlined_call_operand.vmem [shape: f32[1,64], index: 2, kind: input, shape index: {}]
  %s3 = inlined_call_operand.vmem [shape: f32[2,8,32], index: 3, kind: output, shape index: {0}]
  %s4 = inlined_call_operand.vmem [shape: f32[2,8,2], index: 4, kind: output, shape index: {1}]
  %5 = xla_tuple %s3, %s4
  %s6 = sld [smem:[#allocation0]]
  $region53: #{gnn_forward.2} parent=0
    _
  %s8 = ssub.s32 1, %s6
  %s9 = scalar_select 0, %s8, %s6
  loop: start=0, step=1, limit=4
  $region2: #{gnn_forward.2} parent=0 // loop_pre_header
    _
  $region3: #{gnn_forward.2} parent=0 // loop_header
    %s11 = sphi 0, %s15
    %p12 = scmp.ge.s32.totalorder %s11, 4
    %s21 = sphi 0, %s23
    %s24 = sphi 0, %s21
    %s25 = sphi 0, %s24
    %s41 = sphi 0, %s25
    %s45 = sphi 0, %s45
    %s47 = sphi 0, %s45
    %s48 = sphi 0, %s47
    %s62 = sphi 0, %s48
    %s66 = sphi 0, %s66
    %s68 = sphi 0, %s66
    %s69 = sphi 0, %s68
    %s83 = sphi 0, %s69
    %s89 = sphi 0, %s91
    %s92 = sphi 0, %s89
    %s93 = sphi 0, %s92
    %s109 = sphi 0, %s93
    %s115 = sphi 0, %s117
    %s118 = sphi 0, %s115
    %s119 = sphi 0, %s118
    %s135 = sphi 0, %s119
  $region4: #{gnn_forward.2} parent=0 // loop_header_branch
    %14 = sbr.rel (%p12) target = $region8
  $region5: #{gnn_forward.2} parent=0 // loop_body
    %s16 = ssub.s32 %s11, 1
    %s17 = ssub.s32 %s11, 2
    %s18 = sadd.s32 %s11, 1
    %s19 = ssub.s32 %s11, %s18
    %p20 = scmp.eq.s32.totalorder %s19, 0
    %s22 = sadd.s32 %s21, 1
    %s23 = scalar_select %p20, %s21, %s22
    %p26 = pneg %p20
    %p27 = scmp.eq.s32.totalorder %s11, 1
    %p28 = por %p26, %p27
    %p29 = scmp.ne.s32.totalorder %s21, %s24
    %p30 = scmp.eq.s32.totalorder %s11, 0
    %p31 = por %p29, %p30
    %p32 = scmp.ne.s32.totalorder %s21, %s24
    %p33 = scmp.eq.s32.totalorder %s16, 1
    %p34 = por %p32, %p33
    %p35 = scmp.ne.s32.totalorder %s24, %s25
    %p36 = scmp.eq.s32.totalorder %s16, 0
    %p37 = por %p35, %p36
    %p38 = scmp.ne.s32.totalorder %s24, %s25
    %p39 = scmp.eq.s32.totalorder %s17, 1
    %p40 = por %p38, %p39
    %p42 = scmp.ne.s32.totalorder %s25, %s41
    %p43 = scmp.eq.s32.totalorder %s17, 0
    %p44 = por %p42, %p43
    %s46 = sadd.s32 %s45, 1
    %p49 = scmp.eq.s32.totalorder %s11, 1
    %p50 = scmp.ne.s32.totalorder %s45, %s47
    %p51 = scmp.eq.s32.totalorder %s11, 0
    %p52 = por %p50, %p51
    %p53 = scmp.ne.s32.totalorder %s45, %s47
    %p54 = scmp.eq.s32.totalorder %s16, 1
    %p55 = por %p53, %p54
    %p56 = scmp.ne.s32.totalorder %s47, %s48
    %p57 = scmp.eq.s32.totalorder %s16, 0
    %p58 = por %p56, %p57
    %p59 = scmp.ne.s32.totalorder %s47, %s48
    %p60 = scmp.eq.s32.totalorder %s17, 1
    %p61 = por %p59, %p60
    %p63 = scmp.ne.s32.totalorder %s48, %s62
    %p64 = scmp.eq.s32.totalorder %s17, 0
    %p65 = por %p63, %p64
    %s67 = sadd.s32 %s66, 1
    %p70 = scmp.eq.s32.totalorder %s11, 1
    %p71 = scmp.ne.s32.totalorder %s66, %s68
    %p72 = scmp.eq.s32.totalorder %s11, 0
    %p73 = por %p71, %p72
    %p74 = scmp.ne.s32.totalorder %s66, %s68
    %p75 = scmp.eq.s32.totalorder %s16, 1
    %p76 = por %p74, %p75
    %p77 = scmp.ne.s32.totalorder %s68, %s69
    %p78 = scmp.eq.s32.totalorder %s16, 0
    %p79 = por %p77, %p78
    %p80 = scmp.ne.s32.totalorder %s68, %s69
    %p81 = scmp.eq.s32.totalorder %s17, 1
    %p82 = por %p80, %p81
    %p84 = scmp.ne.s32.totalorder %s69, %s83
    %p85 = scmp.eq.s32.totalorder %s17, 0
    %p86 = por %p84, %p85
    %s87 = ssub.s32 %s11, %s18
    %p88 = scmp.eq.s32.totalorder %s87, 0
    %s90 = sadd.s32 %s89, 1
    %s91 = scalar_select %p88, %s89, %s90
    %p94 = pneg %p88
    %p95 = scmp.eq.s32.totalorder %s11, 1
    %p96 = por %p94, %p95
    %p97 = scmp.ne.s32.totalorder %s89, %s92
    %p98 = scmp.eq.s32.totalorder %s11, 0
    %p99 = por %p97, %p98
    %p100 = scmp.ne.s32.totalorder %s89, %s92
    %p101 = scmp.eq.s32.totalorder %s16, 1
    %p102 = por %p100, %p101
    %p103 = scmp.ne.s32.totalorder %s92, %s93
    %p104 = scmp.eq.s32.totalorder %s16, 0
    %p105 = por %p103, %p104
    %p106 = scmp.ne.s32.totalorder %s92, %s93
    %p107 = scmp.eq.s32.totalorder %s17, 1
    %p108 = por %p106, %p107
    %p110 = scmp.ne.s32.totalorder %s93, %s109
    %p111 = scmp.eq.s32.totalorder %s17, 0
    %p112 = por %p110, %p111
    %s113 = ssub.s32 %s11, %s18
    %p114 = scmp.eq.s32.totalorder %s113, 0
    %s116 = sadd.s32 %s115, 1
    %s117 = scalar_select %p114, %s115, %s116
    %p120 = pneg %p114
    %p121 = scmp.eq.s32.totalorder %s11, 1
    %p122 = por %p120, %p121
    %p123 = scmp.ne.s32.totalorder %s115, %s118
    %p124 = scmp.eq.s32.totalorder %s11, 0
    %p125 = por %p123, %p124
    %p126 = scmp.ne.s32.totalorder %s115, %s118
    %p127 = scmp.eq.s32.totalorder %s16, 1
    %p128 = por %p126, %p127
    %p129 = scmp.ne.s32.totalorder %s118, %s119
    %p130 = scmp.eq.s32.totalorder %s16, 0
    %p131 = por %p129, %p130
    %p132 = scmp.ne.s32.totalorder %s118, %s119
    %p133 = scmp.eq.s32.totalorder %s17, 1
    %p134 = por %p132, %p133
    %p136 = scmp.ne.s32.totalorder %s119, %s135
    %p137 = scmp.eq.s32.totalorder %s17, 0
    %p138 = por %p136, %p137
    %p139 = scmp.le.s32.totalorder 1, %s11
    %p140 = scmp.lt.s32.totalorder %s11, 3
    %p141 = pnand %p139, %p140
    %p142 = pneg %p141
    // Predicated region
    $region9: #{gnn_forward.2} parent=5 // pred_check
      _
    $region10: #{gnn_forward.2} parent=5 // pred_check_branch
      %144 = sbr.rel (%p141) target = $region12
    $region11: #{gnn_forward.2} parent=5 // pred_region
      %s145 = ssub.s32 %s11, 1
      // Predicated region
      $region13: #{gnn_forward.2} parent=11 // pred_check
        %p146 = pneg %p58
      $region14: #{gnn_forward.2} parent=11 // pred_check_branch
        %148 = sbr.rel (%p146) target = $region16
      $region15: #{gnn_forward.2} parent=11 // pred_region
        _
      $region16: #{gnn_forward.2} parent=11 // pred_fallthru
        _
      // Predicated region
      $region17: #{gnn_forward.2} parent=11 // pred_check
        %p149 = pneg %p79
      $region18: #{gnn_forward.2} parent=11 // pred_check_branch
        %151 = sbr.rel (%p149) target = $region20
      $region19: #{gnn_forward.2} parent=11 // pred_region
        _
      $region20: #{gnn_forward.2} parent=11 // pred_fallthru
        _
    $region12: #{gnn_forward.2} parent=5 // pred_fallthru
      _
    %p152 = scmp.lt.s32.totalorder %s11, 2
    // Predicated region
    $region21: #{gnn_forward.2} parent=5 // pred_check
      %p153 = pneg %p152
    $region22: #{gnn_forward.2} parent=5 // pred_check_branch
      %155 = sbr.rel (%p153) target = $region24
    $region23: #{gnn_forward.2} parent=5 // pred_region
      // Predicated region
      $region25: #{gnn_forward.2} parent=23 // pred_check
        %p156 = pneg %p31
      $region26: #{gnn_forward.2} parent=23 // pred_check_branch
        %158 = sbr.rel (%p156) target = $region28
      $region27: #{gnn_forward.2} parent=23 // pred_region
        %p159 = scmp.lt.s32.totalorder %s11, 1
        %s160 = scalar_select %p159, %s11, 1
        %s161 = smul.addr %s160, 8
        %s162 = scalar_lea.vmem %s0, %s161
      $region28: #{gnn_forward.2} parent=23 // pred_fallthru
        _
    $region24: #{gnn_forward.2} parent=5 // pred_fallthru
      _
    %p163 = scmp.le.s32.totalorder 1, %s11
    %p164 = scmp.lt.s32.totalorder %s11, 3
    %p165 = pnand %p163, %p164
    %p166 = pneg %p165
    // Predicated region
    $region29: #{gnn_forward.2} parent=5 // pred_check
      _
    $region30: #{gnn_forward.2} parent=5 // pred_check_branch
      %168 = sbr.rel (%p165) target = $region32
    $region31: #{gnn_forward.2} parent=5 // pred_region
      %s169 = ssub.s32 %s11, 1
      %p170 = scmp.lt.s32.totalorder %s16, 1
      %s171 = scalar_select %p170, %s16, 1
      %s172 = smul.addr %s171, 8
      %s173 = scalar_lea.vmem %s0, %s172
      %p174 = pneg %p37
      %p175 = pneg %p34
      %p176 = pneg %p58
      %p177 = pneg %p55
      %p178 = pneg %p79
      %p179 = pneg %p76
      %p180 = pneg %p105
      %p181 = pneg %p102
      %p182 = scmp.lt.s32.totalorder %s16, 1
      %s183 = scalar_select %p182, %s16, 1
      %s184 = smul.addr %s183, 8
      %s185 = scalar_lea.vmem %s3, %s184
      %p186 = pneg %p131
      %p187 = pneg %p128
      %p188 = scmp.lt.s32.totalorder %s16, 1
      %s189 = scalar_select %p188, %s16, 1
      %s190 = smul.addr %s189, 8
      %s191 = scalar_lea.vmem %s4, %s190
      %p192 = scmp.lt.s32.totalorder %s16, 1
      %s193 = scalar_select %p192, %s16, 1
      %s194 = smul.addr %s193, 8
      %s195 = scalar_lea.vmem %s0, %s194
      %p196 = scmp.lt.s32.totalorder %s16, 1
      %s197 = scalar_select %p196, %s16, 1
      %s198 = smul.addr %s197, 8
      %s199 = scalar_lea.vmem %s3, %s198
      %p200 = scmp.lt.s32.totalorder %s16, 1
      %s201 = scalar_select %p200, %s16, 1
      %s202 = smul.addr %s201, 8
      %s203 = scalar_lea.vmem %s4, %s202
      %v204 = vld [vmem:[%s195] sm:$0xff]
      %v205 = vld [vmem:[%s1] sm:$0xff]
      %v206 = vld [vmem:[%s1 + $0x8] sm:$0xff]
      %v207 = vld [vmem:[%s1 + $0x10] sm:$0xff]
      %v208 = vld [vmem:[%s1 + $0x18] sm:$0xff]
      %v209 = vld [vmem:[%s2] sm:$0x1]
      %v211 = vlaneseq
      %v212 = vshrl.u32 %v211, 7
      %v213 = vsub.s32 0, %v212
      %v214 = vrot.slane %v209, %v213
      %vm216 = vcmask 261120
      %v218 = vsel %vm216, %v204, 0
      %220 = vmatprep.subr.mxu0 0.0
      %221 = vmatpush1.msra.mxu0 0.0
      %222 = vmatprep.subr.mxu0 0.0
      %223 = vmatpush1.msra.mxu0 0.0
      %224 = vmatprep.subr.mxu0 0.0
      %225 = vmatpush1.msra.mxu0 0.0
      %226 = vmatprep.subr.mxu0 0.0
      %227 = vmatpush1.msra.mxu0 0.0
      %228 = vmatprep.subr.mxu0 0.0
      %229 = vmatpush1.msra.mxu0 0.0
      %230 = vmatprep.subr.mxu0 0.0
      %231 = vmatpush1.msra.mxu0 0.0
      %232 = vmatprep.subr.mxu0 0.0
      %233 = vmatpush1.msra.mxu0 0.0
      %234 = vmatprep.subr.mxu0 0.0
      %235 = vmatpush1.msra.mxu0 0.0
      %236 = vmatprep.subr.mxu0 0.0
      %237 = vmatpush1.msra.mxu0 0.0
      %238 = vmatprep.subr.mxu0 0.0
      %239 = vmatpush1.msra.mxu0 0.0
      %240 = vmatprep.subr.mxu0 0.0
      %241 = vmatpush1.msra.mxu0 0.0
      %242 = vmatprep.subr.mxu0 0.0
      %243 = vmatpush1.msra.mxu0 0.0
      %244 = vmatprep.subr.mxu0 0.0
      %245 = vmatpush1.msra.mxu0 %v208
      %246 = vmatprep.subr.mxu0 0.0
      %247 = vmatpush1.msra.mxu0 %v207
      %248 = vmatprep.subr.mxu0 0.0
      %249 = vmatpush1.msra.mxu0 %v206
      %250 = vmatprep.subr.mxu0 0.0
      %251 = vmatpush1.msra.mxu0 %v205
      %252 = vmatprep.subr.mxu0 0.0
      %253 = vmatpush2.msra.mxu0 0.0
      %254 = vmatprep.subr.mxu0 0.0
      %255 = vmatpush2.msra.mxu0 0.0
      %256 = vmatprep.subr.mxu0 0.0
      %257 = vmatpush2.msra.mxu0 0.0
      %258 = vmatprep.subr.mxu0 0.0
      %259 = vmatpush2.msra.mxu0 0.0
      %260 = vmatprep.subr.mxu0 0.0
      %261 = vmatpush2.msra.mxu0 0.0
      %262 = vmatprep.subr.mxu0 0.0
      %263 = vmatpush2.msra.mxu0 0.0
      %264 = vmatprep.subr.mxu0 0.0
      %265 = vmatpush2.msra.mxu0 0.0
      %266 = vmatprep.subr.mxu0 0.0
      %267 = vmatpush2.msra.mxu0 0.0
      %268 = vmatprep.subr.mxu0 0.0
      %269 = vmatpush2.msra.mxu0 0.0
      %270 = vmatprep.subr.mxu0 0.0
      %271 = vmatpush2.msra.mxu0 0.0
      %272 = vmatprep.subr.mxu0 0.0
      %273 = vmatpush2.msra.mxu0 0.0
      %274 = vmatprep.subr.mxu0 0.0
      %275 = vmatpush2.msra.mxu0 0.0
      %276 = vmatprep.subr.mxu0 0.0
      %277 = vmatpush2.msra.mxu0 0.0
      %278 = vmatprep.subr.mxu0 0.0
      %279 = vmatpush2.msra.mxu0 0.0
      %280 = vmatprep.subr.mxu0 0.0
      %281 = vmatpush2.msra.mxu0 0.0
      %282 = vmatprep.subr.mxu0 0.0
      %283 = vmatpush2.msra.mxu0 0.0
      %284 = vmatprep.mubr.f32.mxu0 0.0
      %285 = vmatmul.mubr.f32.gmra.mxu0 %v218
      %v286 = vpop.f32.mrf.mxu0
      %v287 = vadd.f32 %v214, %v286
      %v288 = vpop.f32.mrf.mxu0
      %289 = vdwg.mxu0
      %290 = vmatprep.subr.mxu0 0.0
      %291 = vmatpush1.xpose.msra.mxu0 0.0
      %292 = vmatprep.subr.mxu0 0.0
      %293 = vmatpush1.xpose.msra.mxu0 0.0
      %294 = vmatprep.subr.mxu0 0.0
      %295 = vmatpush1.xpose.msra.mxu0 0.0
      %296 = vmatprep.subr.mxu0 0.0
      %297 = vmatpush1.xpose.msra.mxu0 0.0
      %298 = vmatprep.subr.mxu0 0.0
      %299 = vmatpush1.xpose.msra.mxu0 0.0
      %300 = vmatprep.subr.mxu0 0.0
      %301 = vmatpush1.xpose.msra.mxu0 0.0
      %302 = vmatprep.subr.mxu0 0.0
      %303 = vmatpush1.xpose.msra.mxu0 0.0
      %304 = vmatprep.subr.mxu0 0.0
      %305 = vmatpush1.xpose.msra.mxu0 0.0
      %306 = vmatprep.subr.mxu0 0.0
      %307 = vmatpush1.xpose.msra.mxu0 0.0
      %308 = vmatprep.subr.mxu0 0.0
      %309 = vmatpush1.xpose.msra.mxu0 0.0
      %310 = vmatprep.subr.mxu0 0.0
      %311 = vmatpush1.xpose.msra.mxu0 0.0
      %312 = vmatprep.subr.mxu0 0.0
      %313 = vmatpush1.xpose.msra.mxu0 0.0
      %314 = vmatprep.subr.mxu0 0.0
      %315 = vmatpush1.xpose.msra.mxu0 0.0
      %316 = vmatprep.subr.mxu0 0.0
      %317 = vmatpush1.xpose.msra.mxu0 0.0
      %318 = vmatprep.subr.mxu0 0.0
      %319 = vmatpush1.xpose.msra.mxu0 0.0
      %320 = vmatprep.subr.mxu0 0.0
      %v321 = vand.u32 %v218, 4294901760
      %322 = vmatpush1.xpose.msra.mxu0 %v321
      %323 = vmatprep.subr.mxu0 0.0
      %324 = vmatpush2.xpose.msra.mxu0 0.0
      %325 = vmatprep.subr.mxu0 0.0
      %326 = vmatpush2.xpose.msra.mxu0 0.0
      %327 = vmatprep.subr.mxu0 0.0
      %328 = vmatpush2.xpose.msra.mxu0 0.0
      %329 = vmatprep.subr.mxu0 0.0
      %330 = vmatpush2.xpose.msra.mxu0 0.0
      %331 = vmatprep.subr.mxu0 0.0
      %332 = vmatpush2.xpose.msra.mxu0 0.0
      %333 = vmatprep.subr.mxu0 0.0
      %334 = vmatpush2.xpose.msra.mxu0 0.0
      %335 = vmatprep.subr.mxu0 0.0
      %336 = vmatpush2.xpose.msra.mxu0 0.0
      %337 = vmatprep.subr.mxu0 0.0
      %338 = vmatpush2.xpose.msra.mxu0 0.0
      %339 = vmatprep.subr.mxu0 0.0
      %340 = vmatpush2.xpose.msra.mxu0 0.0
      %341 = vmatprep.subr.mxu0 0.0
      %342 = vmatpush2.xpose.msra.mxu0 0.0
      %343 = vmatprep.subr.mxu0 0.0
      %344 = vmatpush2.xpose.msra.mxu0 0.0
      %345 = vmatprep.subr.mxu0 0.0
      %346 = vmatpush2.xpose.msra.mxu0 0.0
      %347 = vmatprep.subr.mxu0 0.0
      %348 = vmatpush2.xpose.msra.mxu0 0.0
      %349 = vmatprep.subr.mxu0 0.0
      %350 = vmatpush2.xpose.msra.mxu0 0.0
      %351 = vmatprep.subr.mxu0 0.0
      %352 = vmatpush2.xpose.msra.mxu0 0.0
      %353 = vmatprep.subr.mxu0 0.0
      %354 = vmatpush2.xpose.msra.mxu0 0.0
      %355 = vmatprep.mubr.f32.mxu0 0.0
      %v356 = vand.u32 %v218, 4294901760
      %v357 = vsub.f32 %v218, %v356
      %v358 = vand.u32 %v357, 4294901760
      %v359 = vsub.f32 %v357, %v358
      %v360 = vand.u32 %v359, 4294901760
      %361 = vmatmul.mubr.f32.gmra.mxu0 %v360
      %v362 = vpop.f32.mrf.mxu0
      %v363 = vadd.f32 0.0, %v362
      %v364 = vpop.f32.mrf.mxu0
      %365 = vdwg.mxu0
      %366 = vmatprep.subr.mxu0 0.0
      %367 = vmatpush1.xpose.msra.mxu0 0.0
      %368 = vmatprep.subr.mxu0 0.0
      %369 = vmatpush1.xpose.msra.mxu0 0.0
      %370 = vmatprep.subr.mxu0 0.0
      %371 = vmatpush1.xpose.msra.mxu0 0.0
      %372 = vmatprep.subr.mxu0 0.0
      %373 = vmatpush1.xpose.msra.mxu0 0.0
      %374 = vmatprep.subr.mxu0 0.0
      %375 = vmatpush1.xpose.msra.mxu0 0.0
      %376 = vmatprep.subr.mxu0 0.0
      %377 = vmatpush1.xpose.msra.mxu0 0.0
      %378 = vmatprep.subr.mxu0 0.0
      %379 = vmatpush1.xpose.msra.mxu0 0.0
      %380 = vmatprep.subr.mxu0 0.0
      %381 = vmatpush1.xpose.msra.mxu0 0.0
      %382 = vmatprep.subr.mxu0 0.0
      %383 = vmatpush1.xpose.msra.mxu0 0.0
      %384 = vmatprep.subr.mxu0 0.0
      %385 = vmatpush1.xpose.msra.mxu0 0.0
      %386 = vmatprep.subr.mxu0 0.0
      %387 = vmatpush1.xpose.msra.mxu0 0.0
      %388 = vmatprep.subr.mxu0 0.0
      %389 = vmatpush1.xpose.msra.mxu0 0.0
      %390 = vmatprep.subr.mxu0 0.0
      %391 = vmatpush1.xpose.msra.mxu0 0.0
      %392 = vmatprep.subr.mxu0 0.0
      %393 = vmatpush1.xpose.msra.mxu0 0.0
      %394 = vmatprep.subr.mxu0 0.0
      %395 = vmatpush1.xpose.msra.mxu0 0.0
      %396 = vmatprep.subr.mxu0 0.0
      %v397 = vand.u32 %v218, 4294901760
      %v398 = vsub.f32 %v218, %v397
      %v399 = vand.u32 %v398, 4294901760
      %v400 = vsub.f32 %v398, %v399
      %v401 = vand.u32 %v400, 4294901760
      %402 = vmatpush1.xpose.msra.mxu0 %v401
      %403 = vmatprep.subr.mxu0 0.0
      %404 = vmatpush2.xpose.msra.mxu0 0.0
      %405 = vmatprep.subr.mxu0 0.0
      %406 = vmatpush2.xpose.msra.mxu0 0.0
      %407 = vmatprep.subr.mxu0 0.0
      %408 = vmatpush2.xpose.msra.mxu0 0.0
      %409 = vmatprep.subr.mxu0 0.0
      %410 = vmatpush2.xpose.msra.mxu0 0.0
      %411 = vmatprep.subr.mxu0 0.0
      %412 = vmatpush2.xpose.msra.mxu0 0.0
      %413 = vmatprep.subr.mxu0 0.0
      %414 = vmatpush2.xpose.msra.mxu0 0.0
      %415 = vmatprep.subr.mxu0 0.0
      %416 = vmatpush2.xpose.msra.mxu0 0.0
      %417 = vmatprep.subr.mxu0 0.0
      %418 = vmatpush2.xpose.msra.mxu0 0.0
      %419 = vmatprep.subr.mxu0 0.0
      %420 = vmatpush2.xpose.msra.mxu0 0.0
      %421 = vmatprep.subr.mxu0 0.0
      %422 = vmatpush2.xpose.msra.mxu0 0.0
      %423 = vmatprep.subr.mxu0 0.0
      %424 = vmatpush2.xpose.msra.mxu0 0.0
      %425 = vmatprep.subr.mxu0 0.0
      %426 = vmatpush2.xpose.msra.mxu0 0.0
      %427 = vmatprep.subr.mxu0 0.0
      %428 = vmatpush2.xpose.msra.mxu0 0.0
      %429 = vmatprep.subr.mxu0 0.0
      %430 = vmatpush2.xpose.msra.mxu0 0.0
      %431 = vmatprep.subr.mxu0 0.0
      %432 = vmatpush2.xpose.msra.mxu0 0.0
      %433 = vmatprep.subr.mxu0 0.0
      %434 = vmatpush2.xpose.msra.mxu0 0.0
      %435 = vmatprep.mubr.f32.mxu0 0.0
      %v436 = vand.u32 %v218, 4294901760
      %437 = vmatmul.mubr.f32.gmra.mxu0 %v436
      %v438 = vpop.f32.mrf.mxu0
      %v439 = vadd.f32 %v363, %v438
      %v440 = vpop.f32.mrf.mxu0
      %441 = vdwg.mxu0
      %442 = vmatprep.subr.mxu0 0.0
      %443 = vmatpush1.xpose.msra.mxu0 0.0
      %444 = vmatprep.subr.mxu0 0.0
      %445 = vmatpush1.xpose.msra.mxu0 0.0
      %446 = vmatprep.subr.mxu0 0.0
      %447 = vmatpush1.xpose.msra.mxu0 0.0
      %448 = vmatprep.subr.mxu0 0.0
      %449 = vmatpush1.xpose.msra.mxu0 0.0
      %450 = vmatprep.subr.mxu0 0.0
      %451 = vmatpush1.xpose.msra.mxu0 0.0
      %452 = vmatprep.subr.mxu0 0.0
      %453 = vmatpush1.xpose.msra.mxu0 0.0
      %454 = vmatprep.subr.mxu0 0.0
      %455 = vmatpush1.xpose.msra.mxu0 0.0
      %456 = vmatprep.subr.mxu0 0.0
      %457 = vmatpush1.xpose.msra.mxu0 0.0
      %458 = vmatprep.subr.mxu0 0.0
      %459 = vmatpush1.xpose.msra.mxu0 0.0
      %460 = vmatprep.subr.mxu0 0.0
      %461 = vmatpush1.xpose.msra.mxu0 0.0
      %462 = vmatprep.subr.mxu0 0.0
      %463 = vmatpush1.xpose.msra.mxu0 0.0
      %464 = vmatprep.subr.mxu0 0.0
      %465 = vmatpush1.xpose.msra.mxu0 0.0
      %466 = vmatprep.subr.mxu0 0.0
      %467 = vmatpush1.xpose.msra.mxu0 0.0
      %468 = vmatprep.subr.mxu0 0.0
      %469 = vmatpush1.xpose.msra.mxu0 0.0
      %470 = vmatprep.subr.mxu0 0.0
      %471 = vmatpush1.xpose.msra.mxu0 0.0
      %472 = vmatprep.subr.mxu0 0.0
      %v473 = vand.u32 %v218, 4294901760
      %v474 = vsub.f32 %v218, %v473
      %475 = vmatpush1.xpose.msra.mxu0 %v474
      %476 = vmatprep.subr.mxu0 0.0
      %477 = vmatpush2.xpose.msra.mxu0 0.0
      %478 = vmatprep.subr.mxu0 0.0
      %479 = vmatpush2.xpose.msra.mxu0 0.0
      %480 = vmatprep.subr.mxu0 0.0
      %481 = vmatpush2.xpose.msra.mxu0 0.0
      %482 = vmatprep.subr.mxu0 0.0
      %483 = vmatpush2.xpose.msra.mxu0 0.0
      %484 = vmatprep.subr.mxu0 0.0
      %485 = vmatpush2.xpose.msra.mxu0 0.0
      %486 = vmatprep.subr.mxu0 0.0
      %487 = vmatpush2.xpose.msra.mxu0 0.0
      %488 = vmatprep.subr.mxu0 0.0
      %489 = vmatpush2.xpose.msra.mxu0 0.0
      %490 = vmatprep.subr.mxu0 0.0
      %491 = vmatpush2.xpose.msra.mxu0 0.0
      %492 = vmatprep.subr.mxu0 0.0
      %493 = vmatpush2.xpose.msra.mxu0 0.0
      %494 = vmatprep.subr.mxu0 0.0
      %495 = vmatpush2.xpose.msra.mxu0 0.0
      %496 = vmatprep.subr.mxu0 0.0
      %497 = vmatpush2.xpose.msra.mxu0 0.0
      %498 = vmatprep.subr.mxu0 0.0
      %499 = vmatpush2.xpose.msra.mxu0 0.0
      %500 = vmatprep.subr.mxu0 0.0
      %501 = vmatpush2.xpose.msra.mxu0 0.0
      %502 = vmatprep.subr.mxu0 0.0
      %503 = vmatpush2.xpose.msra.mxu0 0.0
      %504 = vmatprep.subr.mxu0 0.0
      %505 = vmatpush2.xpose.msra.mxu0 0.0
      %506 = vmatprep.subr.mxu0 0.0
      %507 = vmatpush2.xpose.msra.mxu0 0.0
      %508 = vmatprep.mubr.f32.mxu0 0.0
      %v509 = vand.u32 %v218, 4294901760
      %v510 = vsub.f32 %v218, %v509
      %511 = vmatmul.mubr.f32.gmra.mxu0 %v510
      %v512 = vpop.f32.mrf.mxu0
      %v513 = vadd.f32 %v439, %v512
      %v514 = vpop.f32.mrf.mxu0
      %515 = vdwg.mxu0
      %516 = vmatprep.subr.mxu0 0.0
      %517 = vmatpush1.xpose.msra.mxu0 0.0
      %518 = vmatprep.subr.mxu0 0.0
      %519 = vmatpush1.xpose.msra.mxu0 0.0
      %520 = vmatprep.subr.mxu0 0.0
      %521 = vmatpush1.xpose.msra.mxu0 0.0
      %522 = vmatprep.subr.mxu0 0.0
      %523 = vmatpush1.xpose.msra.mxu0 0.0
      %524 = vmatprep.subr.mxu0 0.0
      %525 = vmatpush1.xpose.msra.mxu0 0.0
      %526 = vmatprep.subr.mxu0 0.0
      %527 = vmatpush1.xpose.msra.mxu0 0.0
      %528 = vmatprep.subr.mxu0 0.0
      %529 = vmatpush1.xpose.msra.mxu0 0.0
      %530 = vmatprep.subr.mxu0 0.0
      %531 = vmatpush1.xpose.msra.mxu0 0.0
      %532 = vmatprep.subr.mxu0 0.0
      %533 = vmatpush1.xpose.msra.mxu0 0.0
      %534 = vmatprep.subr.mxu0 0.0
      %535 = vmatpush1.xpose.msra.mxu0 0.0
      %536 = vmatprep.subr.mxu0 0.0
      %537 = vmatpush1.xpose.msra.mxu0 0.0
      %538 = vmatprep.subr.mxu0 0.0
      %539 = vmatpush1.xpose.msra.mxu0 0.0
      %540 = vmatprep.subr.mxu0 0.0
      %541 = vmatpush1.xpose.msra.mxu0 0.0
      %542 = vmatprep.subr.mxu0 0.0
      %543 = vmatpush1.xpose.msra.mxu0 0.0
      %544 = vmatprep.subr.mxu0 0.0
      %545 = vmatpush1.xpose.msra.mxu0 0.0
      %546 = vmatprep.subr.mxu0 0.0
      %v547 = vand.u32 %v218, 4294901760
      %548 = vmatpush1.xpose.msra.mxu0 %v547
      %549 = vmatprep.subr.mxu0 0.0
      %550 = vmatpush2.xpose.msra.mxu0 0.0
      %551 = vmatprep.subr.mxu0 0.0
      %552 = vmatpush2.xpose.msra.mxu0 0.0
      %553 = vmatprep.subr.mxu0 0.0
      %554 = vmatpush2.xpose.msra.mxu0 0.0
      %555 = vmatprep.subr.mxu0 0.0
      %556 = vmatpush2.xpose.msra.mxu0 0.0
      %557 = vmatprep.subr.mxu0 0.0
      %558 = vmatpush2.xpose.msra.mxu0 0.0
      %559 = vmatprep.subr.mxu0 0.0
      %560 = vmatpush2.xpose.msra.mxu0 0.0
      %561 = vmatprep.subr.mxu0 0.0
      %562 = vmatpush2.xpose.msra.mxu0 0.0
      %563 = vmatprep.subr.mxu0 0.0
      %564 = vmatpush2.xpose.msra.mxu0 0.0
      %565 = vmatprep.subr.mxu0 0.0
      %566 = vmatpush2.xpose.msra.mxu0 0.0
      %567 = vmatprep.subr.mxu0 0.0
      %568 = vmatpush2.xpose.msra.mxu0 0.0
      %569 = vmatprep.subr.mxu0 0.0
      %570 = vmatpush2.xpose.msra.mxu0 0.0
      %571 = vmatprep.subr.mxu0 0.0
      %572 = vmatpush2.xpose.msra.mxu0 0.0
      %573 = vmatprep.subr.mxu0 0.0
      %574 = vmatpush2.xpose.msra.mxu0 0.0
      %575 = vmatprep.subr.mxu0 0.0
      %576 = vmatpush2.xpose.msra.mxu0 0.0
      %577 = vmatprep.subr.mxu0 0.0
      %578 = vmatpush2.xpose.msra.mxu0 0.0
      %579 = vmatprep.subr.mxu0 0.0
      %580 = vmatpush2.xpose.msra.mxu0 0.0
      %581 = vmatprep.mubr.f32.mxu0 0.0
      %v582 = vand.u32 %v218, 4294901760
      %v583 = vsub.f32 %v218, %v582
      %v584 = vand.u32 %v583, 4294901760
      %585 = vmatmul.mubr.f32.gmra.mxu0 %v584
      %v586 = vpop.f32.mrf.mxu0
      %v587 = vadd.f32 %v513, %v586
      %v588 = vpop.f32.mrf.mxu0
      %589 = vdwg.mxu0
      %590 = vmatprep.subr.mxu0 0.0
      %591 = vmatpush1.xpose.msra.mxu0 0.0
      %592 = vmatprep.subr.mxu0 0.0
      %593 = vmatpush1.xpose.msra.mxu0 0.0
      %594 = vmatprep.subr.mxu0 0.0
      %595 = vmatpush1.xpose.msra.mxu0 0.0
      %596 = vmatprep.subr.mxu0 0.0
      %597 = vmatpush1.xpose.msra.mxu0 0.0
      %598 = vmatprep.subr.mxu0 0.0
      %599 = vmatpush1.xpose.msra.mxu0 0.0
      %600 = vmatprep.subr.mxu0 0.0
      %601 = vmatpush1.xpose.msra.mxu0 0.0
      %602 = vmatprep.subr.mxu0 0.0
      %603 = vmatpush1.xpose.msra.mxu0 0.0
      %604 = vmatprep.subr.mxu0 0.0
      %605 = vmatpush1.xpose.msra.mxu0 0.0
      %606 = vmatprep.subr.mxu0 0.0
      %607 = vmatpush1.xpose.msra.mxu0 0.0
      %608 = vmatprep.subr.mxu0 0.0
      %609 = vmatpush1.xpose.msra.mxu0 0.0
      %610 = vmatprep.subr.mxu0 0.0
      %611 = vmatpush1.xpose.msra.mxu0 0.0
      %612 = vmatprep.subr.mxu0 0.0
      %613 = vmatpush1.xpose.msra.mxu0 0.0
      %614 = vmatprep.subr.mxu0 0.0
      %615 = vmatpush1.xpose.msra.mxu0 0.0
      %616 = vmatprep.subr.mxu0 0.0
      %617 = vmatpush1.xpose.msra.mxu0 0.0
      %618 = vmatprep.subr.mxu0 0.0
      %619 = vmatpush1.xpose.msra.mxu0 0.0
      %620 = vmatprep.subr.mxu0 0.0
      %v621 = vand.u32 %v218, 4294901760
      %v622 = vsub.f32 %v218, %v621
      %v623 = vand.u32 %v622, 4294901760
      %624 = vmatpush1.xpose.msra.mxu0 %v623
      %625 = vmatprep.subr.mxu0 0.0
      %626 = vmatpush2.xpose.msra.mxu0 0.0
      %627 = vmatprep.subr.mxu0 0.0
      %628 = vmatpush2.xpose.msra.mxu0 0.0
      %629 = vmatprep.subr.mxu0 0.0
      %630 = vmatpush2.xpose.msra.mxu0 0.0
      %631 = vmatprep.subr.mxu0 0.0
      %632 = vmatpush2.xpose.msra.mxu0 0.0
      %633 = vmatprep.subr.mxu0 0.0
      %634 = vmatpush2.xpose.msra.mxu0 0.0
      %635 = vmatprep.subr.mxu0 0.0
      %636 = vmatpush2.xpose.msra.mxu0 0.0
      %637 = vmatprep.subr.mxu0 0.0
      %638 = vmatpush2.xpose.msra.mxu0 0.0
      %639 = vmatprep.subr.mxu0 0.0
      %640 = vmatpush2.xpose.msra.mxu0 0.0
      %641 = vmatprep.subr.mxu0 0.0
      %642 = vmatpush2.xpose.msra.mxu0 0.0
      %643 = vmatprep.subr.mxu0 0.0
      %644 = vmatpush2.xpose.msra.mxu0 0.0
      %645 = vmatprep.subr.mxu0 0.0
      %646 = vmatpush2.xpose.msra.mxu0 0.0
      %647 = vmatprep.subr.mxu0 0.0
      %648 = vmatpush2.xpose.msra.mxu0 0.0
      %649 = vmatprep.subr.mxu0 0.0
      %650 = vmatpush2.xpose.msra.mxu0 0.0
      %651 = vmatprep.subr.mxu0 0.0
      %652 = vmatpush2.xpose.msra.mxu0 0.0
      %653 = vmatprep.subr.mxu0 0.0
      %654 = vmatpush2.xpose.msra.mxu0 0.0
      %655 = vmatprep.subr.mxu0 0.0
      %656 = vmatpush2.xpose.msra.mxu0 0.0
      %657 = vmatprep.mubr.f32.mxu0 0.0
      %v658 = vand.u32 %v218, 4294901760
      %659 = vmatmul.mubr.f32.gmra.mxu0 %v658
      %v660 = vpop.f32.mrf.mxu0
      %v661 = vadd.f32 %v587, %v660
      %v662 = vpop.f32.mrf.mxu0
      %663 = vdwg.mxu0
      %664 = vmatprep.subr.mxu0 0.0
      %665 = vmatpush1.xpose.msra.mxu0 0.0
      %666 = vmatprep.subr.mxu0 0.0
      %667 = vmatpush1.xpose.msra.mxu0 0.0
      %668 = vmatprep.subr.mxu0 0.0
      %669 = vmatpush1.xpose.msra.mxu0 0.0
      %670 = vmatprep.subr.mxu0 0.0
      %671 = vmatpush1.xpose.msra.mxu0 0.0
      %672 = vmatprep.subr.mxu0 0.0
      %673 = vmatpush1.xpose.msra.mxu0 0.0
      %674 = vmatprep.subr.mxu0 0.0
      %675 = vmatpush1.xpose.msra.mxu0 0.0
      %676 = vmatprep.subr.mxu0 0.0
      %677 = vmatpush1.xpose.msra.mxu0 0.0
      %678 = vmatprep.subr.mxu0 0.0
      %679 = vmatpush1.xpose.msra.mxu0 0.0
      %680 = vmatprep.subr.mxu0 0.0
      %681 = vmatpush1.xpose.msra.mxu0 0.0
      %682 = vmatprep.subr.mxu0 0.0
      %683 = vmatpush1.xpose.msra.mxu0 0.0
      %684 = vmatprep.subr.mxu0 0.0
      %685 = vmatpush1.xpose.msra.mxu0 0.0
      %686 = vmatprep.subr.mxu0 0.0
      %687 = vmatpush1.xpose.msra.mxu0 0.0
      %688 = vmatprep.subr.mxu0 0.0
      %689 = vmatpush1.xpose.msra.mxu0 0.0
      %690 = vmatprep.subr.mxu0 0.0
      %691 = vmatpush1.xpose.msra.mxu0 0.0
      %692 = vmatprep.subr.mxu0 0.0
      %693 = vmatpush1.xpose.msra.mxu0 0.0
      %694 = vmatprep.subr.mxu0 0.0
      %v695 = vand.u32 %v218, 4294901760
      %696 = vmatpush1.xpose.msra.mxu0 %v695
      %697 = vmatprep.subr.mxu0 0.0
      %698 = vmatpush2.xpose.msra.mxu0 0.0
      %699 = vmatprep.subr.mxu0 0.0
      %700 = vmatpush2.xpose.msra.mxu0 0.0
      %701 = vmatprep.subr.mxu0 0.0
      %702 = vmatpush2.xpose.msra.mxu0 0.0
      %703 = vmatprep.subr.mxu0 0.0
      %704 = vmatpush2.xpose.msra.mxu0 0.0
      %705 = vmatprep.subr.mxu0 0.0
      %706 = vmatpush2.xpose.msra.mxu0 0.0
      %707 = vmatprep.subr.mxu0 0.0
      %708 = vmatpush2.xpose.msra.mxu0 0.0
      %709 = vmatprep.subr.mxu0 0.0
      %710 = vmatpush2.xpose.msra.mxu0 0.0
      %711 = vmatprep.subr.mxu0 0.0
      %712 = vmatpush2.xpose.msra.mxu0 0.0
      %713 = vmatprep.subr.mxu0 0.0
      %714 = vmatpush2.xpose.msra.mxu0 0.0
      %715 = vmatprep.subr.mxu0 0.0
      %716 = vmatpush2.xpose.msra.mxu0 0.0
      %717 = vmatprep.subr.mxu0 0.0
      %718 = vmatpush2.xpose.msra.mxu0 0.0
      %719 = vmatprep.subr.mxu0 0.0
      %720 = vmatpush2.xpose.msra.mxu0 0.0
      %721 = vmatprep.subr.mxu0 0.0
      %722 = vmatpush2.xpose.msra.mxu0 0.0
      %723 = vmatprep.subr.mxu0 0.0
      %724 = vmatpush2.xpose.msra.mxu0 0.0
      %725 = vmatprep.subr.mxu0 0.0
      %726 = vmatpush2.xpose.msra.mxu0 0.0
      %727 = vmatprep.subr.mxu0 0.0
      %728 = vmatpush2.xpose.msra.mxu0 0.0
      %729 = vmatprep.mubr.f32.mxu0 0.0
      %v730 = vand.u32 %v218, 4294901760
      %731 = vmatmul.mubr.f32.gmra.mxu0 %v730
      %v732 = vpop.f32.mrf.mxu0
      %v733 = vadd.f32 %v661, %v732
      %v734 = vpop.f32.mrf.mxu0
      %735 = vdwg.mxu0
      %v736 = vlaneseq
      %v737 = vand.u32 %v736, 127
      %vm738 = vcmask 64512
      %v739 = vsel %vm738, %v733, -inf
      %740 = vmax.xlane.f32.xlu0 %v739
      %v741 = vpop.xlane.xlu0 %740
      %vm742 = vcmp.eq.f32.partialorder %v733, %v741
      %v743 = vsel %vm742, %v737, 8
      %v744 = vsel %vm738, %v743, 2147483647
      %v745 = vand.u32 %v744, 65535
      %v746 = vshra.s32 %v744, 16
      %v747 = vcvt.s32.f32 %v745
      %v748 = vcvt.s32.f32 %v746
      %749 = vmin.xlane.f32.xlu0 %v748
      %v750 = vpop.xlane.xlu0 %749
      %vm751 = vcmp.eq.f32.partialorder %v748, %v750
      %v752 = vsel %vm751, %v747, inf
      %753 = vmin.xlane.f32.xlu0 %v752
      %v754 = vpop.xlane.xlu0 %753
      %v755 = vcvt.f32.s32 %v754
      %v756 = vcvt.f32.s32 %v750
      %v757 = vshll.u32 %v756, 16
      %v758 = vadd.s32 %v757, %v755
      %vm759 = vcmp.eq.s32.totalorder %v737, %v758
      %v760 = vsel %vm759, -inf, %v733
      %v761 = vsel %vm738, %v760, -inf
      %762 = vmax.xlane.f32.xlu0 %v761
      %v763 = vpop.xlane.xlu0 %762
      %vm764 = vcmp.eq.f32.partialorder %v760, %v763
      %v765 = vsel %vm764, %v737, 8
      %v766 = vsel %vm738, %v765, 2147483647
      %v767 = vand.u32 %v766, 65535
      %v768 = vshra.s32 %v766, 16
      %v769 = vcvt.s32.f32 %v767
      %v770 = vcvt.s32.f32 %v768
      %771 = vmin.xlane.f32.xlu0 %v770
      %v772 = vpop.xlane.xlu0 %771
      %vm773 = vcmp.eq.f32.partialorder %v770, %v772
      %v774 = vsel %vm773, %v769, inf
      %775 = vmin.xlane.f32.xlu0 %v774
      %v776 = vpop.xlane.xlu0 %775
      %v777 = vcvt.f32.s32 %v776
      %v778 = vcvt.f32.s32 %v772
      %v779 = vshll.u32 %v778, 16
      %v780 = vadd.s32 %v779, %v777
      %vm781 = vcmp.eq.s32.totalorder %v737, %v780
      %v782 = vsel %vm781, -inf, %v760
      %v783 = vsel %vm738, %v782, -inf
      %784 = vmax.xlane.f32.xlu0 %v783
      %v785 = vpop.xlane.xlu0 %784
      %vm786 = vcmp.eq.f32.partialorder %v782, %v785
      %v787 = vsel %vm786, %v737, 8
      %v788 = vsel %vm738, %v787, 2147483647
      %v789 = vand.u32 %v788, 65535
      %v790 = vshra.s32 %v788, 16
      %v791 = vcvt.s32.f32 %v789
      %v792 = vcvt.s32.f32 %v790
      %793 = vmin.xlane.f32.xlu0 %v792
      %v794 = vpop.xlane.xlu0 %793
      %vm795 = vcmp.eq.f32.partialorder %v792, %v794
      %v796 = vsel %vm795, %v791, inf
      %797 = vmin.xlane.f32.xlu0 %v796
      %v798 = vpop.xlane.xlu0 %797
      %v799 = vcvt.f32.s32 %v798
      %v800 = vcvt.f32.s32 %v794
      %v801 = vshll.u32 %v800, 16
      %v802 = vadd.s32 %v801, %v799
      %vm803 = vcmp.eq.s32.totalorder %v737, %v802
      %v804 = vsel %vm803, -inf, %v782
      %v805 = vsel %vm738, %v804, -inf
      %806 = vmax.xlane.f32.xlu0 %v805
      %v807 = vpop.xlane.xlu0 %806
      %vm808 = vcmp.ge.f32.partialorder %v733, %v807
      %v809 = vsel %vm808, 1, 0
      %v810 = vcvt.s32.f32 %v809
      %v811 = vsel %vm738, %v810, 0.0
      %812 = vadd.xlane.f32.xlu0 %v811
      %v813 = vpop.xlane.xlu0 %812
      %v814 = vrsqrt.pop %v813
      %v815 = vmul.f32 %v814, %v287
      %817 = vrot.lane.b32.xlu0 %v815, 96
      %v818 = vpop.permute.xlu0 %817
      %v821 = vsel %vm738, %v810, 0
      %823 = vmatprep.subr.mxu0 0.0
      %824 = vmatpush1.msra.mxu0 0.0
      %825 = vmatprep.subr.mxu0 0.0
      %826 = vmatpush1.msra.mxu0 0.0
      %827 = vmatprep.subr.mxu0 0.0
      %828 = vmatpush1.msra.mxu0 0.0
      %829 = vmatprep.subr.mxu0 0.0
      %830 = vmatpush1.msra.mxu0 0.0
      %831 = vmatprep.subr.mxu0 0.0
      %832 = vmatpush1.msra.mxu0 0.0
      %833 = vmatprep.subr.mxu0 0.0
      %834 = vmatpush1.msra.mxu0 0.0
      %835 = vmatprep.subr.mxu0 0.0
      %836 = vmatpush1.msra.mxu0 0.0
      %837 = vmatprep.subr.mxu0 0.0
      %838 = vmatpush1.msra.mxu0 0.0
      %839 = vmatprep.subr.mxu0 0.0
      %840 = vmatpush1.msra.mxu0 0.0
      %841 = vmatprep.subr.mxu0 0.0
      %842 = vmatpush1.msra.mxu0 0.0
      %843 = vmatprep.subr.mxu0 0.0
      %844 = vmatpush1.msra.mxu0 0.0
      %845 = vmatprep.subr.mxu0 0.0
      %846 = vmatpush1.msra.mxu0 0.0
      %847 = vmatprep.subr.mxu0 0.0
      %848 = vmatpush1.msra.mxu0 0.0
      %849 = vmatprep.subr.mxu0 0.0
      %850 = vmatpush1.msra.mxu0 0.0
      %851 = vmatprep.subr.mxu0 0.0
      %852 = vmatpush1.msra.mxu0 0.0
      %853 = vmatprep.subr.mxu0 0.0
      %854 = vmatpush1.msra.mxu0 %v818
      %855 = vmatprep.subr.mxu0 0.0
      %856 = vmatpush2.msra.mxu0 0.0
      %857 = vmatprep.subr.mxu0 0.0
      %858 = vmatpush2.msra.mxu0 0.0
      %859 = vmatprep.subr.mxu0 0.0
      %860 = vmatpush2.msra.mxu0 0.0
      %861 = vmatprep.subr.mxu0 0.0
      %862 = vmatpush2.msra.mxu0 0.0
      %863 = vmatprep.subr.mxu0 0.0
      %864 = vmatpush2.msra.mxu0 0.0
      %865 = vmatprep.subr.mxu0 0.0
      %866 = vmatpush2.msra.mxu0 0.0
      %867 = vmatprep.subr.mxu0 0.0
      %868 = vmatpush2.msra.mxu0 0.0
      %869 = vmatprep.subr.mxu0 0.0
      %870 = vmatpush2.msra.mxu0 0.0
      %871 = vmatprep.subr.mxu0 0.0
      %872 = vmatpush2.msra.mxu0 0.0
      %873 = vmatprep.subr.mxu0 0.0
      %874 = vmatpush2.msra.mxu0 0.0
      %875 = vmatprep.subr.mxu0 0.0
      %876 = vmatpush2.msra.mxu0 0.0
      %877 = vmatprep.subr.mxu0 0.0
      %878 = vmatpush2.msra.mxu0 0.0
      %879 = vmatprep.subr.mxu0 0.0
      %880 = vmatpush2.msra.mxu0 0.0
      %881 = vmatprep.subr.mxu0 0.0
      %882 = vmatpush2.msra.mxu0 0.0
      %883 = vmatprep.subr.mxu0 0.0
      %884 = vmatpush2.msra.mxu0 0.0
      %885 = vmatprep.subr.mxu0 0.0
      %886 = vmatpush2.msra.mxu0 0.0
      %887 = vmatprep.mubr.f32.mxu0 0.0
      %888 = vmatmul.mubr.f32.gmra.mxu0 %v821
      %v889 = vpop.f32.mrf.mxu0
      %v890 = vadd.f32 0.0, %v889
      %v891 = vpop.f32.mrf.mxu0
      %892 = vdwg.mxu0
      %v893 = vmul.f32 %v814, %v890
      %v894 = vadd.f32 %v893, %v287
      %895 = vst.msk [vmem:[%s199] sm:$0xff] %vm216, %v894
      %v896 = vsel %vm216, %v894, 0.0
      %897 = vadd.xlane.f32.xlu0 %v896
      %v898 = vpop.xlane.xlu0 %897
      %vm899 = vcmask 7168
      %900 = vst.msk [vmem:[%s203] sm:$0xff] %vm899, %v898
      %v901 = vmul.f32 %v894, %v894
      %v902 = vsel %vm216, %v901, 0.0
      %903 = vadd.xlane.f32.xlu0 %v902
      %v904 = vpop.xlane.xlu0 %903
      %vm905 = vcmask 15368
      %906 = vst.msk [vmem:[%s203] sm:$0xff] %vm905, %v904
      %p907 = scmp.lt.s32.totalorder %s16, 1
      %s908 = scalar_select %p907, %s16, 1
      %s909 = smul.addr %s908, 8
      %s910 = scalar_lea.vmem %s3, %s909
      %p911 = scmp.lt.s32.totalorder %s16, 1
      %s912 = scalar_select %p911, %s16, 1
      %s913 = smul.addr %s912, 8
      %s914 = scalar_lea.vmem %s4, %s913
      // Predicated region
      $region33: #{gnn_forward.2} parent=31 // pred_check
        %p915 = pneg %p102
      $region34: #{gnn_forward.2} parent=31 // pred_check_branch
        %917 = sbr.rel (%p915) target = $region36
      $region35: #{gnn_forward.2} parent=31 // pred_region
        _
      $region36: #{gnn_forward.2} parent=31 // pred_fallthru
        _
      // Predicated region
      $region37: #{gnn_forward.2} parent=31 // pred_check
        %p918 = pneg %p128
      $region38: #{gnn_forward.2} parent=31 // pred_check_branch
        %920 = sbr.rel (%p918) target = $region40
      $region39: #{gnn_forward.2} parent=31 // pred_region
        _
      $region40: #{gnn_forward.2} parent=31 // pred_fallthru
        _
    $region32: #{gnn_forward.2} parent=5 // pred_fallthru
      _
    %p921 = scmp.le.s32.totalorder 2, %s11
    // Predicated region
    $region41: #{gnn_forward.2} parent=5 // pred_check
      %p922 = pneg %p921
    $region42: #{gnn_forward.2} parent=5 // pred_check_branch
      %924 = sbr.rel (%p922) target = $region44
    $region43: #{gnn_forward.2} parent=5 // pred_region
      %s925 = ssub.s32 %s11, 2
      // Predicated region
      $region45: #{gnn_forward.2} parent=43 // pred_check
        %p926 = pneg %p108
      $region46: #{gnn_forward.2} parent=43 // pred_check_branch
        %928 = sbr.rel (%p926) target = $region48
      $region47: #{gnn_forward.2} parent=43 // pred_region
        %p929 = scmp.lt.s32.totalorder %s17, 1
        %s930 = scalar_select %p929, %s17, 1
        %s931 = smul.addr %s930, 8
        %s932 = scalar_lea.vmem %s3, %s931
      $region48: #{gnn_forward.2} parent=43 // pred_fallthru
        _
      // Predicated region
      $region49: #{gnn_forward.2} parent=43 // pred_check
        %p933 = pneg %p134
      $region50: #{gnn_forward.2} parent=43 // pred_check_branch
        %935 = sbr.rel (%p933) target = $region52
      $region51: #{gnn_forward.2} parent=43 // pred_region
        %p936 = scmp.lt.s32.totalorder %s17, 1
        %s937 = scalar_select %p936, %s17, 1
        %s938 = smul.addr %s937, 8
        %s939 = scalar_lea.vmem %s4, %s938
      $region52: #{gnn_forward.2} parent=43 // pred_fallthru
        _
    $region44: #{gnn_forward.2} parent=5 // pred_fallthru
      _
  $region6: #{gnn_forward.2} parent=0 // loop_footer
    %s15 = sadd.s32 1, %s11
  $region7: #{gnn_forward.2} parent=0 // loop_footer_branch
    %10 = sbr.rel target = $region3
  $region8: #{gnn_forward.2} parent=0 // loop_exit
    _

</llo_original>
